<compile_context>
chip_gen: v5e
topology: v5e:2x2
jax: 0.10.0
libtpu: 0.0.40
codegen_flags: <defaults>
</compile_context>

<pallas_src>
import jax
import jax.numpy as jnp
from jax.experimental import pallas as pl
from jax.experimental.pallas import tpu as pltpu


def _mlp_kernel(x_ref, wgu_ref, wd_ref, o_ref, acc_ref):
    # x_ref:   (tm, H)       native dtype
    # wgu_ref: (H, 2*ti)     fused [gate | up] slab for intermediate tile k
    # wd_ref:  (ti, H)       down-proj slab for intermediate tile k
    # o_ref:   (tm, H)       output tile (resident across the k axis)
    # acc_ref: (tm, H) f32   VMEM accumulator
    k = pl.program_id(1)
    nk = pl.num_programs(1)
    ti = wd_ref.shape[0]

    @pl.when(k == 0)
    def _init():
        acc_ref[...] = jnp.zeros_like(acc_ref)

    # Fused gate/up projection: one MXU matmul, f32 accumulation.
    gu = jnp.dot(x_ref[...], wgu_ref[...],
                 preferred_element_type=jnp.float32)          # (tm, 2*ti)
    gate = gu[:, :ti]
    up = gu[:, ti:]

    # SiluAndMul in f32 on the VPU; cast down so the second matmul is a
    # single-pass native-dtype MXU op.
    h = (gate * jax.nn.sigmoid(gate) * up).astype(wd_ref.dtype)

    acc_ref[...] += jnp.dot(h, wd_ref[...],
                            preferred_element_type=jnp.float32)  # (tm, H)

    @pl.when(k == nk - 1)
    def _finalize():
        o_ref[...] = acc_ref[...].astype(o_ref.dtype)


def _vmem_estimate_bytes(tm, ti, H, in_itemsize):
    """Rough working-set estimate: double-buffered streamed blocks +
    resident accumulator + activation temporaries."""
    x_blk = tm * H * in_itemsize
    wgu_blk = H * 2 * ti * in_itemsize
    wd_blk = ti * H * in_itemsize
    out_blk = tm * H * in_itemsize
    acc = tm * H * 4
    act = tm * 2 * ti * 4
    return 2 * (x_blk + wgu_blk + wd_blk + out_blk) + acc + act


def deepseek_v2_mlp(x, w_gate, w_up, w_down, *, tm=256, ti=1024):
    """DeepseekV2MLP forward.

    x:      [T, H]
    w_gate: [H, I]  (gate half of gate_up_proj.weight.T)
    w_up:   [H, I]  (up   half of gate_up_proj.weight.T)
    w_down: [I, H]  (down_proj.weight.T)

    tm: token tile (target near-full MXU occupancy: 128 on v5e, 256 on v6e/v7x)
    ti: intermediate tile (pick smaller on v7x so streamed weight slabs fit
        its 64 MiB VMEM).
    """
    T, H = x.shape
    I = w_gate.shape[1]
    tm = min(tm, T)
    ti = min(ti, I)
    assert T % tm == 0, "token count must be divisible by the token tile"
    assert I % ti == 0, "intermediate size must be divisible by ti"
    assert w_up.shape == (H, I) and w_down.shape == (I, H)

    nk = I // ti

    # Fuse gate/up into a single weight so each grid step does one wide
    # matmul.  Slab k holds [gate_tile_k | up_tile_k] contiguously so the
    # in-kernel split is lane-aligned.  (In a real model this re-layout is
    # done once at weight-load time, not per call.)
    w_gu = jnp.concatenate(
        [w_gate.reshape(H, nk, ti), w_up.reshape(H, nk, ti)], axis=2
    ).reshape(H, 2 * I)

    in_itemsize = jnp.dtype(x.dtype).itemsize
    flops = 2 * T * H * (2 * I) + 2 * T * I * H
    bytes_accessed = (x.size + w_gu.size + w_down.size + T * H) * in_itemsize
    cost = pl.CostEstimate(flops=flops, transcendentals=T * I,
                           bytes_accessed=bytes_accessed)

    params = dict(dimension_semantics=("parallel", "arbitrary"))
    est = _vmem_estimate_bytes(tm, ti, H, in_itemsize)
    if est > 32 * 1024 * 1024:
        # Only raise the scoped-VMEM limit when the working set needs it.
        params["vmem_limit_bytes"] = min(int(est * 1.2), 112 * 1024 * 1024)

    return pl.pallas_call(
        _mlp_kernel,
        out_shape=jax.ShapeDtypeStruct((T, H), x.dtype),
        grid_spec=pltpu.PrefetchScalarGridSpec(
            num_scalar_prefetch=0,
            grid=(T // tm, nk),
            in_specs=[
                pl.BlockSpec((tm, H), lambda i, k: (i, 0)),      # x
                pl.BlockSpec((H, 2 * ti), lambda i, k: (0, k)),  # fused gate|up
                pl.BlockSpec((ti, H), lambda i, k: (k, 0)),      # down-proj
            ],
            out_specs=pl.BlockSpec((tm, H), lambda i, k: (i, 0)),
            scratch_shapes=[pltpu.VMEM((tm, H), jnp.float32)],
        ),
        compiler_params=pltpu.CompilerParams(**params),
        cost_estimate=cost,
    )(x, w_gu, w_down)


def _reference(x, w_gate, w_up, w_down):
    xf = x.astype(jnp.float32)
    gate = xf @ w_gate.astype(jnp.float32)
    up = xf @ w_up.astype(jnp.float32)
    h = gate * jax.nn.sigmoid(gate) * up
    return (h @ w_down.astype(jnp.float32)).astype(x.dtype)


if __name__ == "__main__":
    # Small, lane-aligned shapes consistent with the module.
    num_tokens = 256
    hidden_size = 256
    intermediate_size = 512
    dtype = jnp.bfloat16

    key = jax.random.PRNGKey(0)
    kx, kg, ku, kd = jax.random.split(key, 4)

    x = jax.random.normal(kx, (num_tokens, hidden_size), jnp.float32).astype(dtype)
    w_gate = (jax.random.normal(kg, (hidden_size, intermediate_size), jnp.float32)
              * 0.05).astype(dtype)
    w_up = (jax.random.normal(ku, (hidden_size, intermediate_size), jnp.float32)
            * 0.05).astype(dtype)
    w_down = (jax.random.normal(kd, (intermediate_size, hidden_size), jnp.float32)
              * 0.05).astype(dtype)

    # Use explicit small tiles so both grid axes (token tiling and the
    # intermediate-dim accumulation) are exercised: grid = (2, 2).
    out = deepseek_v2_mlp(x, w_gate, w_up, w_down, tm=128, ti=256)
    out = jax.block_until_ready(out)

    ref = _reference(x, w_gate, w_up, w_down)
    assert out.shape == (num_tokens, hidden_size)
    assert jnp.allclose(out.astype(jnp.float32), ref.astype(jnp.float32),
                        atol=3e-2, rtol=3e-2), "mismatch vs reference"

    print("KERNEL_OK")
</pallas_src>

<mosaic_0001>
module attributes {stable_mosaic.version = 11 : i64} {
  func.func @_mlp_kernel(%arg0: i32, %arg1: i32, %arg2: memref<128x256xbf16, #tpu.memory_space<vmem>>, %arg3: memref<256x512xbf16, #tpu.memory_space<vmem>>, %arg4: memref<256x256xbf16, #tpu.memory_space<vmem>>, %arg5: memref<128x256xbf16, #tpu.memory_space<vmem>>, %arg6: memref<128x256xf32, #tpu.memory_space<vmem>>) attributes {dimension_semantics = [#tpu.dimension_semantics<parallel>, #tpu.dimension_semantics<arbitrary>], iteration_bounds = array<i64: 2, 2>, scalar_prefetch = 0 : i64, scratch_operands = 1 : i64, tpu.core_type = #tpu.core_type<tc>, window_params = [{transform_indices = @transform_0, window_bounds = array<i64: 128, 256>}, {transform_indices = @transform_1, window_bounds = array<i64: 256, 512>}, {transform_indices = @transform_2, window_bounds = array<i64: 256, 256>}, {transform_indices = @transform_3, window_bounds = array<i64: 128, 256>}]} {
    %c0_i32 = arith.constant 0 : i32
    %0 = arith.cmpi eq, %arg1, %c0_i32 : i32
    %1 = arith.extui %0 : i1 to i32
    %c0_i32_0 = arith.constant 0 : i32
    %2 = arith.cmpi ne, %1, %c0_i32_0 : i32
    scf.if %2 {
      %cst_13 = arith.constant 0.000000e+00 : f32
      %24 = vector.broadcast %cst_13 : f32 to vector<128x256xf32>
      %c0_14 = arith.constant 0 : index
      %c0_15 = arith.constant 0 : index
      %25 = vector.load %arg6[%c0_14, %c0_15] : memref<128x256xf32, #tpu.memory_space<vmem>>, vector<128x256xf32>
      tpu.vector_store %arg6[%c0_14, %c0_15], %24 {strides = array<i32>} : memref<128x256xf32, #tpu.memory_space<vmem>>, vector<128x256xf32>,
    } else {
    }
    %c0 = arith.constant 0 : index
    %c0_1 = arith.constant 0 : index
    %3 = vector.load %arg2[%c0, %c0_1] : memref<128x256xbf16, #tpu.memory_space<vmem>>, vector<128x256xbf16>
    %c0_2 = arith.constant 0 : index
    %c0_3 = arith.constant 0 : index
    %4 = vector.load %arg3[%c0_2, %c0_3] : memref<256x512xbf16, #tpu.memory_space<vmem>>, vector<256x512xbf16>
    %cst = arith.constant dense<0.000000e+00> : vector<128x512xf32>
    %5 = tpu.matmul %3, %4, %cst {dimension_numbers = #tpu.dot_dimension_numbers<[1], [0], [0], [1], [0, 0, 1, 1], [], []>} : vector<128x256xbf16>, vector<256x512xbf16>, vector<128x512xf32> -> vector<128x512xf32>
    %6 = vector.extract_strided_slice %5 {offsets = [0, 0], sizes = [128, 256], strides = [1, 1]} : vector<128x512xf32> to vector<128x256xf32>
    %7 = vector.extract_strided_slice %5 {offsets = [0, 256], sizes = [128, 256], strides = [1, 1]} : vector<128x512xf32> to vector<128x256xf32>
    %8 = arith.negf %6 : vector<128x256xf32>
    %9 = math.exp %8 : vector<128x256xf32>
    %cst_4 = arith.constant 1.000000e+00 : f32
    %10 = vector.broadcast %cst_4 : f32 to vector<128x256xf32>
    %11 = arith.addf %10, %9 : vector<128x256xf32>
    %12 = arith.divf %10, %11 : vector<128x256xf32>
    %13 = arith.mulf %6, %12 : vector<128x256xf32>
    %14 = arith.mulf %13, %7 : vector<128x256xf32>
    %15 = arith.truncf %14 : vector<128x256xf32> to vector<128x256xbf16>
    %c0_5 = arith.constant 0 : index
    %c0_6 = arith.constant 0 : index
    %16 = vector.load %arg6[%c0_5, %c0_6] : memref<128x256xf32, #tpu.memory_space<vmem>>, vector<128x256xf32>
    %c0_7 = arith.constant 0 : index
    %c0_8 = arith.constant 0 : index
    %17 = vector.load %arg4[%c0_7, %c0_8] : memref<256x256xbf16, #tpu.memory_space<vmem>>, vector<256x256xbf16>
    %cst_9 = arith.constant dense<0.000000e+00> : vector<128x256xf32>
    %18 = tpu.matmul %15, %17, %cst_9 {dimension_numbers = #tpu.dot_dimension_numbers<[1], [0], [0], [1], [0, 0, 1, 1], [], []>} : vector<128x256xbf16>, vector<256x256xbf16>, vector<128x256xf32> -> vector<128x256xf32>
    %19 = arith.addf %16, %18 : vector<128x256xf32>
    %c0_10 = arith.constant 0 : index
    %c0_11 = arith.constant 0 : index
    %20 = vector.load %arg6[%c0_10, %c0_11] : memref<128x256xf32, #tpu.memory_space<vmem>>, vector<128x256xf32>
    tpu.vector_store %arg6[%c0_10, %c0_11], %19 {strides = array<i32>} : memref<128x256xf32, #tpu.memory_space<vmem>>, vector<128x256xf32>,
    %c1_i32 = arith.constant 1 : i32
    %21 = arith.cmpi eq, %arg1, %c1_i32 : i32
    %22 = arith.extui %21 : i1 to i32
    %c0_i32_12 = arith.constant 0 : i32
    %23 = arith.cmpi ne, %22, %c0_i32_12 : i32
    scf.if %23 {
      %c0_13 = arith.constant 0 : index
      %c0_14 = arith.constant 0 : index
      %24 = vector.load %arg6[%c0_13, %c0_14] : memref<128x256xf32, #tpu.memory_space<vmem>>, vector<128x256xf32>
      %25 = arith.truncf %24 : vector<128x256xf32> to vector<128x256xbf16>
      %c0_15 = arith.constant 0 : index
      %c0_16 = arith.constant 0 : index
      %26 = vector.load %arg5[%c0_15, %c0_16] : memref<128x256xbf16, #tpu.memory_space<vmem>>, vector<128x256xbf16>
      tpu.vector_store %arg5[%c0_15, %c0_16], %25 {strides = array<i32>} : memref<128x256xbf16, #tpu.memory_space<vmem>>, vector<128x256xbf16>,
    } else {
    }
    return
  }
  func.func @transform_0(%arg0: i32, %arg1: i32) -> (i32, i32) {
    %c0_i32 = arith.constant 0 : i32
    %c0_i32_0 = arith.constant 0 : i32
    return %arg0, %c0_i32 : i32, i32
  }
  func.func @transform_1(%arg0: i32, %arg1: i32) -> (i32, i32) {
    %c0_i32 = arith.constant 0 : i32
    %c0_i32_0 = arith.constant 0 : i32
    return %c0_i32, %arg1 : i32, i32
  }
  func.func @transform_2(%arg0: i32, %arg1: i32) -> (i32, i32) {
    %c0_i32 = arith.constant 0 : i32
    %c0_i32_0 = arith.constant 0 : i32
    return %arg1, %c0_i32 : i32, i32
  }
  func.func @transform_3(%arg0: i32, %arg1: i32) -> (i32, i32) {
    %c0_i32 = arith.constant 0 : i32
    %c0_i32_0 = arith.constant 0 : i32
    return %arg0, %c0_i32 : i32, i32
  }
}

</mosaic_0001>

<llo_original>
// kernel: tpu_custom_call.1
$region0: #{tpu_custom_call.1}
  #allocation0 [shape = 'u32[]', space=smem, size = 0x4, offset = 0x4, fixed_abs, tag = 'smem constant byte address 0x4 - core index']
  #allocation1 [shape = 'u32[72,128]{1,0:T(1,128)}', space=vmem, size = 0x9000, scoped, tag = 'internal scratch']
  #allocation2 [shape = 'f32[128,256]{1,0:T(8,128)}', space=vmem, size = 0x20000, scoped, tag = 'scratch operand']
  %s0 = inlined_call_operand.hbm [shape: bf16[256,256], index: 0, kind: input, shape index: {}]
  %s1 = inlined_call_operand.hbm [shape: bf16[256,1024], index: 1, kind: input, shape index: {}]
  %s2 = inlined_call_operand.hbm [shape: bf16[512,256], index: 2, kind: input, shape index: {}]
  %s3 = inlined_call_operand.hbm [shape: bf16[256,256], index: 3, kind: output, shape index: {}]
  %s4 = sld [smem:[#allocation0]]
  $region65: #{tpu_custom_call.1} parent=0
    _
  %s6 = ssub.s32 1, %s4
  %s7 = scalar_select 0, %s6, %s4
  $region1: #{tpu_custom_call.1} parent=0
    #allocation3 [shape = 'u8[131072]{0}', space=vmem, size = 0x20000, scoped, tag = 'input window, operand 0']
    #allocation4 [shape = 's32[2]{0}', space=sflag, size = 0x8, scoped, tag = 'scoped memory for tpu_custom_call.1']
    #allocation5 [shape = 's32[2]{0}', space=sflag, size = 0x8, scoped, tag = 'scoped memory for tpu_custom_call.1']
    #allocation6 [shape = 'u8[524288]{0}', space=vmem, size = 0x80000, scoped, tag = 'input window, operand 1']
    #allocation7 [shape = 's32[2]{0}', space=sflag, size = 0x8, scoped, tag = 'scoped memory for tpu_custom_call.1']
    #allocation8 [shape = 'u8[262144]{0}', space=vmem, size = 0x40000, scoped, tag = 'input window, operand 2']
    #allocation9 [shape = 'u8[131072]{0}', space=vmem, size = 0x20000, scoped, tag = 'output window, operand 0']
    %8 = vsyncpa [#allocation4], 0
    %s9 = scalar_lea.sflag [#allocation4], 1
    %10 = vsyncpa %s9, 0
    %11 = vsyncpa [#allocation7], 0
    %s12 = scalar_lea.sflag [#allocation7], 1
    %13 = vsyncpa %s12, 0
    %14 = vsyncpa [#allocation5], 0
    %s15 = scalar_lea.sflag [#allocation5], 1
    %16 = vsyncpa %s15, 0
    loop: start=0, step=1, limit=6
    $region2: #{tpu_custom_call.1} parent=1 // loop_pre_header
      _
    $region3: #{tpu_custom_call.1} parent=1 // loop_header
      %s18 = sphi 0, %s22
      %p19 = scmp.ge.s32.totalorder %s18, 6
      %s25 = sphi 0, %s37
      %s26 = sphi 0, %s33
      %s27 = sphi 0, %s25
      %s28 = sphi 0, %s26
      %s29 = sphi 0, %s27
      %s30 = sphi 0, %s28
      %s40 = sphi 0, %s42
      %s43 = sphi 0, %s40
      %s44 = sphi 0, %s43
      %s60 = sphi 0, %s44
      %s66 = sphi 0, %s68
      %s69 = sphi 0, %s66
      %s70 = sphi 0, %s69
      %s86 = sphi 0, %s70
      %s92 = sphi 0, %s94
      %s95 = sphi 0, %s92
      %s96 = sphi 0, %s95
      %s112 = sphi 0, %s96
      %s118 = sphi 0, %s120
      %s121 = sphi 0, %s118
      %s122 = sphi 0, %s121
      %s138 = sphi 0, %s122
    $region4: #{tpu_custom_call.1} parent=1 // loop_header_branch
      %21 = sbr.rel (%p19) target = $region8
    $region5: #{tpu_custom_call.1} parent=1 // loop_body
      %s23 = ssub.s32 %s18, 1
      %s24 = ssub.s32 %s18, 2
      %s31 = sadd.s32 1, %s26
      %p32 = scmp.ge.s32.totalorder %s31, 2
      %s33 = scalar_select %p32, 0, %s31
      %s34 = sadd.s32 1, %s25
      %s35 = scalar_select %p32, %s34, %s25
      %p36 = scmp.ge.s32.totalorder %s35, 2
      %s37 = scalar_select %p36, 0, %s35
      %s38 = ssub.s32 %s25, %s37
      %p39 = scmp.eq.s32.totalorder %s38, 0
      %s41 = sadd.s32 %s40, 1
      %s42 = scalar_select %p39, %s40, %s41
      %p45 = pneg %p39
      %p46 = scmp.eq.s32.totalorder %s18, 3
      %p47 = por %p45, %p46
      %p48 = scmp.ne.s32.totalorder %s40, %s43
      %p49 = scmp.eq.s32.totalorder %s18, 0
      %p50 = por %p48, %p49
      %p51 = scmp.ne.s32.totalorder %s40, %s43
      %p52 = scmp.eq.s32.totalorder %s23, 3
      %p53 = por %p51, %p52
      %p54 = scmp.ne.s32.totalorder %s43, %s44
      %p55 = scmp.eq.s32.totalorder %s23, 0
      %p56 = por %p54, %p55
      %p57 = scmp.ne.s32.totalorder %s43, %s44
      %p58 = scmp.eq.s32.totalorder %s24, 3
      %p59 = por %p57, %p58
      %p61 = scmp.ne.s32.totalorder %s44, %s60
      %p62 = scmp.eq.s32.totalorder %s24, 0
      %p63 = por %p61, %p62
      %s64 = ssub.s32 %s26, %s33
      %p65 = scmp.eq.s32.totalorder %s64, 0
      %s67 = sadd.s32 %s66, 1
      %s68 = scalar_select %p65, %s66, %s67
      %p71 = pneg %p65
      %p72 = scmp.eq.s32.totalorder %s18, 3
      %p73 = por %p71, %p72
      %p74 = scmp.ne.s32.totalorder %s66, %s69
      %p75 = scmp.eq.s32.totalorder %s18, 0
      %p76 = por %p74, %p75
      %p77 = scmp.ne.s32.totalorder %s66, %s69
      %p78 = scmp.eq.s32.totalorder %s23, 3
      %p79 = por %p77, %p78
      %p80 = scmp.ne.s32.totalorder %s69, %s70
      %p81 = scmp.eq.s32.totalorder %s23, 0
      %p82 = por %p80, %p81
      %p83 = scmp.ne.s32.totalorder %s69, %s70
      %p84 = scmp.eq.s32.totalorder %s24, 3
      %p85 = por %p83, %p84
      %p87 = scmp.ne.s32.totalorder %s70, %s86
      %p88 = scmp.eq.s32.totalorder %s24, 0
      %p89 = por %p87, %p88
      %s90 = ssub.s32 %s26, %s33
      %p91 = scmp.eq.s32.totalorder %s90, 0
      %s93 = sadd.s32 %s92, 1
      %s94 = scalar_select %p91, %s92, %s93
      %p97 = pneg %p91
      %p98 = scmp.eq.s32.totalorder %s18, 3
      %p99 = por %p97, %p98
      %p100 = scmp.ne.s32.totalorder %s92, %s95
      %p101 = scmp.eq.s32.totalorder %s18, 0
      %p102 = por %p100, %p101
      %p103 = scmp.ne.s32.totalorder %s92, %s95
      %p104 = scmp.eq.s32.totalorder %s23, 3
      %p105 = por %p103, %p104
      %p106 = scmp.ne.s32.totalorder %s95, %s96
      %p107 = scmp.eq.s32.totalorder %s23, 0
      %p108 = por %p106, %p107
      %p109 = scmp.ne.s32.totalorder %s95, %s96
      %p110 = scmp.eq.s32.totalorder %s24, 3
      %p111 = por %p109, %p110
      %p113 = scmp.ne.s32.totalorder %s96, %s112
      %p114 = scmp.eq.s32.totalorder %s24, 0
      %p115 = por %p113, %p114
      %s116 = ssub.s32 %s25, %s37
      %p117 = scmp.eq.s32.totalorder %s116, 0
      %s119 = sadd.s32 %s118, 1
      %s120 = scalar_select %p117, %s118, %s119
      %p123 = pneg %p117
      %p124 = scmp.eq.s32.totalorder %s18, 3
      %p125 = por %p123, %p124
      %p126 = scmp.ne.s32.totalorder %s118, %s121
      %p127 = scmp.eq.s32.totalorder %s18, 0
      %p128 = por %p126, %p127
      %p129 = scmp.ne.s32.totalorder %s118, %s121
      %p130 = scmp.eq.s32.totalorder %s23, 3
      %p131 = por %p129, %p130
      %p132 = scmp.ne.s32.totalorder %s121, %s122
      %p133 = scmp.eq.s32.totalorder %s23, 0
      %p134 = por %p132, %p133
      %p135 = scmp.ne.s32.totalorder %s121, %s122
      %p136 = scmp.eq.s32.totalorder %s24, 3
      %p137 = por %p135, %p136
      %p139 = scmp.ne.s32.totalorder %s122, %s138
      %p140 = scmp.eq.s32.totalorder %s24, 0
      %p141 = por %p139, %p140
      %p142 = scmp.le.s32.totalorder 1, %s18
      %p143 = scmp.lt.s32.totalorder %s18, 5
      %p144 = pnand %p142, %p143
      %p145 = pneg %p144
      // Predicated region
      $region9: #{tpu_custom_call.1} parent=5 // pred_check
        _
      $region10: #{tpu_custom_call.1} parent=5 // pred_check_branch
        %147 = sbr.rel (%p144) target = $region12
      $region11: #{tpu_custom_call.1} parent=5 // pred_region
        %s148 = ssub.s32 %s18, 1
      $region12: #{tpu_custom_call.1} parent=5 // pred_fallthru
        _
      %p149 = scmp.lt.s32.totalorder %s18, 4
      // Predicated region
      $region13: #{tpu_custom_call.1} parent=5 // pred_check
        %p150 = pneg %p149
      $region14: #{tpu_custom_call.1} parent=5 // pred_check_branch
        %152 = sbr.rel (%p150) target = $region16
      $region15: #{tpu_custom_call.1} parent=5 // pred_region
        // Predicated region
        $region17: #{tpu_custom_call.1} parent=15 // pred_check
          %p153 = pneg %p50
        $region18: #{tpu_custom_call.1} parent=15 // pred_check_branch
          %155 = sbr.rel (%p153) target = $region20
        $region19: #{tpu_custom_call.1} parent=15 // pred_region
          %s156 = sand.u32 %s40, 1
          %s157 = scalar_lea.sflag [#allocation4], %s156
          %s158 = sand.u32 %s40, 1
          %s159 = smul.addr %s158, 128
          %s160 = scalar_lea.vmem [#allocation3], %s159
          %s161 = smul.u32 16, %s25
          %163 = vsyncadd %s157, 0
          %s164 = smul.addr %s161, 2
          %s165 = smul.addr %s164, 4
          %s166 = scalar_lea.hbm %s0, %s165
          %s167 = sshll.u32 %s166, 4
          %s168 = int_to_ptr.hbm [resolvable:$true] %s167
          %s169 = sshll.u32 %s160, 4
          %s170 = int_to_ptr.vmem [resolvable:$true] %s169
          %175 = dma.hbm_to_vmem [thread:$0]  %s168, 2048, %s170, %s157, 128, 128, 8
        $region20: #{tpu_custom_call.1} parent=15 // pred_fallthru
          _
        // Predicated region
        $region21: #{tpu_custom_call.1} parent=15 // pred_check
          %p176 = pneg %p76
        $region22: #{tpu_custom_call.1} parent=15 // pred_check_branch
          %178 = sbr.rel (%p176) target = $region24
        $region23: #{tpu_custom_call.1} parent=15 // pred_region
          %s179 = sand.u32 %s18, 1
          %s180 = scalar_lea.sflag [#allocation7], %s179
          %s181 = sand.u32 %s66, 1
          %s182 = smul.addr %s181, 512
          %s183 = scalar_lea.vmem [#allocation6], %s182
          %s184 = smul.u32 4, %s26
          %186 = vsyncadd %s180, 0
          %s187 = smul.addr %s184, 4
          %s188 = scalar_lea.hbm %s1, %s187
          %s189 = sshll.u32 %s188, 4
          %s190 = int_to_ptr.hbm [resolvable:$true] %s189
          %s191 = sshll.u32 %s183, 4
          %s192 = int_to_ptr.vmem [resolvable:$true] %s191
          %197 = dma.hbm_to_vmem [thread:$0]  %s190, 8192, %s192, %s180, 512, 256, 16
        $region24: #{tpu_custom_call.1} parent=15 // pred_fallthru
          _
        // Predicated region
        $region25: #{tpu_custom_call.1} parent=15 // pred_check
          %p198 = pneg %p102
        $region26: #{tpu_custom_call.1} parent=15 // pred_check_branch
          %200 = sbr.rel (%p198) target = $region28
        $region27: #{tpu_custom_call.1} parent=15 // pred_region
          %s201 = sand.u32 %s18, 1
          %s202 = scalar_lea.sflag [#allocation7], %s201
          %s203 = sand.u32 %s92, 1
          %s204 = smul.addr %s203, 256
          %s205 = scalar_lea.vmem [#allocation8], %s204
          %s206 = smul.u32 32, %s26
          %208 = vsyncadd %s202, 0
          %s209 = smul.addr %s206, 2
          %s210 = smul.addr %s209, 4
          %s211 = scalar_lea.hbm %s2, %s210
          %s212 = sshll.u32 %s211, 4
          %s213 = int_to_ptr.hbm [resolvable:$true] %s212
          %s214 = sshll.u32 %s205, 4
          %s215 = int_to_ptr.vmem [resolvable:$true] %s214
          %220 = dma.hbm_to_vmem [thread:$0]  %s213, 4096, %s215, %s202, 128, 128, 8
        $region28: #{tpu_custom_call.1} parent=15 // pred_fallthru
          _
      $region16: #{tpu_custom_call.1} parent=5 // pred_fallthru
        _
      %p221 = scmp.le.s32.totalorder 1, %s18
      %p222 = scmp.lt.s32.totalorder %s18, 5
      %p223 = pnand %p221, %p222
      %p224 = pneg %p223
      // Predicated region
      $region29: #{tpu_custom_call.1} parent=5 // pred_check
        _
      $region30: #{tpu_custom_call.1} parent=5 // pred_check_branch
        %226 = sbr.rel (%p223) target = $region32
      $region31: #{tpu_custom_call.1} parent=5 // pred_region
        %s227 = ssub.s32 %s18, 1
        %s228 = sand.u32 %s43, 1
        %s229 = scalar_lea.sflag [#allocation4], %s228
        %s230 = sand.u32 %s43, 1
        %s231 = smul.addr %s230, 128
        %s232 = scalar_lea.vmem [#allocation3], %s231
        // Predicated region
        $region33: #{tpu_custom_call.1} parent=31 // pred_check
          %p233 = pneg %p56
        $region34: #{tpu_custom_call.1} parent=31 // pred_check_branch
          %235 = sbr.rel (%p233) target = $region36
        $region35: #{tpu_custom_call.1} parent=31 // pred_region
          %237 = dma.done %s229, 2048
        $region36: #{tpu_custom_call.1} parent=31 // pred_fallthru
          _
        %s238 = sand.u32 %s23, 1
        %s239 = scalar_lea.sflag [#allocation7], %s238
        %s240 = sand.u32 %s69, 1
        %s241 = smul.addr %s240, 512
        %s242 = scalar_lea.vmem [#allocation6], %s241
        // Predicated region
        $region37: #{tpu_custom_call.1} parent=31 // pred_check
          %p243 = pneg %p82
        $region38: #{tpu_custom_call.1} parent=31 // pred_check_branch
          %245 = sbr.rel (%p243) target = $region40
        $region39: #{tpu_custom_call.1} parent=31 // pred_region
          %247 = dma.done %s239, 8192
        $region40: #{tpu_custom_call.1} parent=31 // pred_fallthru
          _
        %s248 = sand.u32 %s23, 1
        %s249 = scalar_lea.sflag [#allocation7], %s248
        %s250 = sand.u32 %s95, 1
        %s251 = smul.addr %s250, 256
        %s252 = scalar_lea.vmem [#allocation8], %s251
        // Predicated region
        $region41: #{tpu_custom_call.1} parent=31 // pred_check
          %p253 = pneg %p108
        $region42: #{tpu_custom_call.1} parent=31 // pred_check_branch
          %255 = sbr.rel (%p253) target = $region44
        $region43: #{tpu_custom_call.1} parent=31 // pred_region
          %257 = dma.done %s249, 4096
        $region44: #{tpu_custom_call.1} parent=31 // pred_fallthru
          _
        %s258 = sand.u32 %s43, 1
        %s259 = scalar_lea.sflag [#allocation4], %s258
        %s260 = sand.u32 %s43, 1
        %s261 = smul.addr %s260, 128
        %s262 = scalar_lea.vmem [#allocation3], %s261
        %p263 = pneg %p56
        %p264 = pneg %p53
        %s265 = sand.u32 %s23, 1
        %s266 = scalar_lea.sflag [#allocation7], %s265
        %s267 = sand.u32 %s69, 1
        %s268 = smul.addr %s267, 512
        %s269 = scalar_lea.vmem [#allocation6], %s268
        %p270 = pneg %p82
        %p271 = pneg %p79
        %s272 = sand.u32 %s23, 1
        %s273 = scalar_lea.sflag [#allocation7], %s272
        %s274 = sand.u32 %s95, 1
        %s275 = smul.addr %s274, 256
        %s276 = scalar_lea.vmem [#allocation8], %s275
        %p277 = pneg %p108
        %p278 = pneg %p105
        %p279 = pneg %p134
        %p280 = pneg %p131
        %s281 = sand.u32 %s121, 1
        %s282 = scalar_lea.sflag [#allocation5], %s281
        %s283 = sand.u32 %s121, 1
        %s284 = smul.addr %s283, 128
        %s285 = scalar_lea.vmem [#allocation9], %s284
        %s286 = smul.u32 16, %s27
        %s287 = smul.u32 4, %s28
        %s288 = smul.u32 32, %s28
        %s289 = smul.u32 16, %s27
        %p290 = scmp.eq.s32.totalorder %s28, 0
        // Predicated region
        $region45: #{tpu_custom_call.1} parent=31 // pred_check
          %p291 = pneg %p290
        $region46: #{tpu_custom_call.1} parent=31 // pred_check_branch
          %293 = sbr.rel (%p291) target = $region48
        $region47: #{tpu_custom_call.1} parent=31 // pred_region
          %294 = vst [vmem:[#allocation2] sm:$0xff] 0.0
          %295 = vst [vmem:[#allocation2 + $0x8] sm:$0xff] 0.0
          %296 = vst [vmem:[#allocation2 + $0x10] sm:$0xff] 0.0
          %297 = vst [vmem:[#allocation2 + $0x18] sm:$0xff] 0.0
          %298 = vst [vmem:[#allocation2 + $0x20] sm:$0xff] 0.0
          %299 = vst [vmem:[#allocation2 + $0x28] sm:$0xff] 0.0
          %300 = vst [vmem:[#allocation2 + $0x30] sm:$0xff] 0.0
          %301 = vst [vmem:[#allocation2 + $0x38] sm:$0xff] 0.0
          %302 = vst [vmem:[#allocation2 + $0x40] sm:$0xff] 0.0
          %303 = vst [vmem:[#allocation2 + $0x48] sm:$0xff] 0.0
          %304 = vst [vmem:[#allocation2 + $0x50] sm:$0xff] 0.0
          %305 = vst [vmem:[#allocation2 + $0x58] sm:$0xff] 0.0
          %306 = vst [vmem:[#allocation2 + $0x60] sm:$0xff] 0.0
          %307 = vst [vmem:[#allocation2 + $0x68] sm:$0xff] 0.0
          %308 = vst [vmem:[#allocation2 + $0x70] sm:$0xff] 0.0
          %309 = vst [vmem:[#allocation2 + $0x78] sm:$0xff] 0.0
          %310 = vst [vmem:[#allocation2 + $0x80] sm:$0xff] 0.0
          %311 = vst [vmem:[#allocation2 + $0x88] sm:$0xff] 0.0
          %312 = vst [vmem:[#allocation2 + $0x90] sm:$0xff] 0.0
          %313 = vst [vmem:[#allocation2 + $0x98] sm:$0xff] 0.0
          %314 = vst [vmem:[#allocation2 + $0xa0] sm:$0xff] 0.0
          %315 = vst [vmem:[#allocation2 + $0xa8] sm:$0xff] 0.0
          %316 = vst [vmem:[#allocation2 + $0xb0] sm:$0xff] 0.0
          %317 = vst [vmem:[#allocation2 + $0xb8] sm:$0xff] 0.0
          %318 = vst [vmem:[#allocation2 + $0xc0] sm:$0xff] 0.0
          %319 = vst [vmem:[#allocation2 + $0xc8] sm:$0xff] 0.0
          %320 = vst [vmem:[#allocation2 + $0xd0] sm:$0xff] 0.0
          %321 = vst [vmem:[#allocation2 + $0xd8] sm:$0xff] 0.0
          %322 = vst [vmem:[#allocation2 + $0xe0] sm:$0xff] 0.0
          %323 = vst [vmem:[#allocation2 + $0xe8] sm:$0xff] 0.0
          %324 = vst [vmem:[#allocation2 + $0xf0] sm:$0xff] 0.0
          %325 = vst [vmem:[#allocation2 + $0xf8] sm:$0xff] 0.0
        $region48: #{tpu_custom_call.1} parent=31 // pred_fallthru
          _
        %v326 = vld [vmem:[%s232] sm:$0xff]
        %v327 = vld [vmem:[%s232 + $0x8] sm:$0xff]
        %v328 = vld [vmem:[%s232 + $0x10] sm:$0xff]
        %v329 = vld [vmem:[%s232 + $0x18] sm:$0xff]
        %v330 = vld [vmem:[%s232 + $0x20] sm:$0xff]
        %v331 = vld [vmem:[%s232 + $0x28] sm:$0xff]
        %v332 = vld [vmem:[%s232 + $0x30] sm:$0xff]
        %v333 = vld [vmem:[%s232 + $0x38] sm:$0xff]
        %v334 = vld [vmem:[%s232 + $0x40] sm:$0xff]
        %v335 = vld [vmem:[%s232 + $0x48] sm:$0xff]
        %v336 = vld [vmem:[%s232 + $0x50] sm:$0xff]
        %v337 = vld [vmem:[%s232 + $0x58] sm:$0xff]
        %v338 = vld [vmem:[%s232 + $0x60] sm:$0xff]
        %v339 = vld [vmem:[%s232 + $0x68] sm:$0xff]
        %v340 = vld [vmem:[%s232 + $0x70] sm:$0xff]
        %v341 = vld [vmem:[%s232 + $0x78] sm:$0xff]
        %v342 = vld [vmem:[%s242] sm:$0xff]
        %v343 = vld [vmem:[%s242 + $0x8] sm:$0xff]
        %v344 = vld [vmem:[%s242 + $0x10] sm:$0xff]
        %v345 = vld [vmem:[%s242 + $0x18] sm:$0xff]
        %v346 = vld [vmem:[%s242 + $0x20] sm:$0xff]
        %v347 = vld [vmem:[%s242 + $0x28] sm:$0xff]
        %v348 = vld [vmem:[%s242 + $0x30] sm:$0xff]
        %v349 = vld [vmem:[%s242 + $0x38] sm:$0xff]
        %v350 = vld [vmem:[%s242 + $0x40] sm:$0xff]
        %v351 = vld [vmem:[%s242 + $0x48] sm:$0xff]
        %v352 = vld [vmem:[%s242 + $0x50] sm:$0xff]
        %v353 = vld [vmem:[%s242 + $0x58] sm:$0xff]
        %v354 = vld [vmem:[%s242 + $0x60] sm:$0xff]
        %v355 = vld [vmem:[%s242 + $0x68] sm:$0xff]
        %v356 = vld [vmem:[%s242 + $0x70] sm:$0xff]
        %v357 = vld [vmem:[%s242 + $0x78] sm:$0xff]
        %v358 = vld [vmem:[%s242 + $0x80] sm:$0xff]
        %v359 = vld [vmem:[%s242 + $0x88] sm:$0xff]
        %v360 = vld [vmem:[%s242 + $0x90] sm:$0xff]
        %v361 = vld [vmem:[%s242 + $0x98] sm:$0xff]
        %v362 = vld [vmem:[%s242 + $0xa0] sm:$0xff]
        %v363 = vld [vmem:[%s242 + $0xa8] sm:$0xff]
        %v364 = vld [vmem:[%s242 + $0xb0] sm:$0xff]
        %v365 = vld [vmem:[%s242 + $0xb8] sm:$0xff]
        %v366 = vld [vmem:[%s242 + $0xc0] sm:$0xff]
        %v367 = vld [vmem:[%s242 + $0xc8] sm:$0xff]
        %v368 = vld [vmem:[%s242 + $0xd0] sm:$0xff]
        %v369 = vld [vmem:[%s242 + $0xd8] sm:$0xff]
        %v370 = vld [vmem:[%s242 + $0xe0] sm:$0xff]
        %v371 = vld [vmem:[%s242 + $0xe8] sm:$0xff]
        %v372 = vld [vmem:[%s242 + $0xf0] sm:$0xff]
        %v373 = vld [vmem:[%s242 + $0xf8] sm:$0xff]
        %v374 = vld [vmem:[%s242 + $0x100] sm:$0xff]
        %v375 = vld [vmem:[%s242 + $0x108] sm:$0xff]
        %v376 = vld [vmem:[%s242 + $0x110] sm:$0xff]
        %v377 = vld [vmem:[%s242 + $0x118] sm:$0xff]
        %v378 = vld [vmem:[%s242 + $0x120] sm:$0xff]
        %v379 = vld [vmem:[%s242 + $0x128] sm:$0xff]
        %v380 = vld [vmem:[%s242 + $0x130] sm:$0xff]
        %v381 = vld [vmem:[%s242 + $0x138] sm:$0xff]
        %v382 = vld [vmem:[%s242 + $0x140] sm:$0xff]
        %v383 = vld [vmem:[%s242 + $0x148] sm:$0xff]
        %v384 = vld [vmem:[%s242 + $0x150] sm:$0xff]
        %v385 = vld [vmem:[%s242 + $0x158] sm:$0xff]
        %v386 = vld [vmem:[%s242 + $0x160] sm:$0xff]
        %v387 = vld [vmem:[%s242 + $0x168] sm:$0xff]
        %v388 = vld [vmem:[%s242 + $0x170] sm:$0xff]
        %v389 = vld [vmem:[%s242 + $0x178] sm:$0xff]
        %v390 = vld [vmem:[%s242 + $0x180] sm:$0xff]
        %v391 = vld [vmem:[%s242 + $0x188] sm:$0xff]
        %v392 = vld [vmem:[%s242 + $0x190] sm:$0xff]
        %v393 = vld [vmem:[%s242 + $0x198] sm:$0xff]
        %v394 = vld [vmem:[%s242 + $0x1a0] sm:$0xff]
        %v395 = vld [vmem:[%s242 + $0x1a8] sm:$0xff]
        %v396 = vld [vmem:[%s242 + $0x1b0] sm:$0xff]
        %v397 = vld [vmem:[%s242 + $0x1b8] sm:$0xff]
        %v398 = vld [vmem:[%s242 + $0x1c0] sm:$0xff]
        %v399 = vld [vmem:[%s242 + $0x1c8] sm:$0xff]
        %v400 = vld [vmem:[%s242 + $0x1d0] sm:$0xff]
        %v401 = vld [vmem:[%s242 + $0x1d8] sm:$0xff]
        %v402 = vld [vmem:[%s242 + $0x1e0] sm:$0xff]
        %v403 = vld [vmem:[%s242 + $0x1e8] sm:$0xff]
        %v404 = vld [vmem:[%s242 + $0x1f0] sm:$0xff]
        %v405 = vld [vmem:[%s242 + $0x1f8] sm:$0xff]
        %v422 = vunpack.c.l.b16 %v326
        %v423 = vunpack.c.h.b16 %v326
        %v424 = vunpack.c.l.b16 %v327
        %v425 = vunpack.c.h.b16 %v327
        %v426 = vunpack.c.l.b16 %v328
        %v427 = vunpack.c.h.b16 %v328
        %v428 = vunpack.c.l.b16 %v329
        %v429 = vunpack.c.h.b16 %v329
        %v430 = vunpack.c.l.b16 %v330
        %v431 = vunpack.c.h.b16 %v330
        %v432 = vunpack.c.l.b16 %v331
        %v433 = vunpack.c.h.b16 %v331
        %v434 = vunpack.c.l.b16 %v332
        %v435 = vunpack.c.h.b16 %v332
        %v436 = vunpack.c.l.b16 %v333
        %v437 = vunpack.c.h.b16 %v333
        %v438 = vunpack.c.l.b16 %v334
        %v439 = vunpack.c.h.b16 %v334
        %v440 = vunpack.c.l.b16 %v335
        %v441 = vunpack.c.h.b16 %v335
        %v442 = vunpack.c.l.b16 %v336
        %v443 = vunpack.c.h.b16 %v336
        %v444 = vunpack.c.l.b16 %v337
        %v445 = vunpack.c.h.b16 %v337
        %v446 = vunpack.c.l.b16 %v338
        %v447 = vunpack.c.h.b16 %v338
        %v448 = vunpack.c.l.b16 %v339
        %v449 = vunpack.c.h.b16 %v339
        %v450 = vunpack.c.l.b16 %v340
        %v451 = vunpack.c.h.b16 %v340
        %v452 = vunpack.c.l.b16 %v341
        %v453 = vunpack.c.h.b16 %v341
        %v454 = vpack.c.b16 %v424, %v422
        %v455 = vpack.c.b16 %v425, %v423
        %v456 = vpack.c.b16 %v428, %v426
        %v457 = vpack.c.b16 %v429, %v427
        %v458 = vpack.c.b16 %v432, %v430
        %v459 = vpack.c.b16 %v433, %v431
        %v460 = vpack.c.b16 %v436, %v434
        %v461 = vpack.c.b16 %v437, %v435
        %v462 = vpack.c.b16 %v440, %v438
        %v463 = vpack.c.b16 %v441, %v439
        %v464 = vpack.c.b16 %v444, %v442
        %v465 = vpack.c.b16 %v445, %v443
        %v466 = vpack.c.b16 %v448, %v446
        %v467 = vpack.c.b16 %v449, %v447
        %v468 = vpack.c.b16 %v452, %v450
        %v469 = vpack.c.b16 %v453, %v451
        %v550 = vunpack.c.l.b16 %v342
        %v551 = vunpack.c.h.b16 %v342
        %v552 = vunpack.c.l.b16 %v343
        %v553 = vunpack.c.h.b16 %v343
        %v554 = vunpack.c.l.b16 %v344
        %v555 = vunpack.c.h.b16 %v344
        %v556 = vunpack.c.l.b16 %v345
        %v557 = vunpack.c.h.b16 %v345
        %v558 = vunpack.c.l.b16 %v346
        %v559 = vunpack.c.h.b16 %v346
        %v560 = vunpack.c.l.b16 %v347
        %v561 = vunpack.c.h.b16 %v347
        %v562 = vunpack.c.l.b16 %v348
        %v563 = vunpack.c.h.b16 %v348
        %v564 = vunpack.c.l.b16 %v349
        %v565 = vunpack.c.h.b16 %v349
        %v566 = vunpack.c.l.b16 %v350
        %v567 = vunpack.c.h.b16 %v350
        %v568 = vunpack.c.l.b16 %v351
        %v569 = vunpack.c.h.b16 %v351
        %v570 = vunpack.c.l.b16 %v352
        %v571 = vunpack.c.h.b16 %v352
        %v572 = vunpack.c.l.b16 %v353
        %v573 = vunpack.c.h.b16 %v353
        %v574 = vunpack.c.l.b16 %v354
        %v575 = vunpack.c.h.b16 %v354
        %v576 = vunpack.c.l.b16 %v355
        %v577 = vunpack.c.h.b16 %v355
        %v578 = vunpack.c.l.b16 %v356
        %v579 = vunpack.c.h.b16 %v356
        %v580 = vunpack.c.l.b16 %v357
        %v581 = vunpack.c.h.b16 %v357
        %v582 = vunpack.c.l.b16 %v358
        %v583 = vunpack.c.h.b16 %v358
        %v584 = vunpack.c.l.b16 %v359
        %v585 = vunpack.c.h.b16 %v359
        %v586 = vunpack.c.l.b16 %v360
        %v587 = vunpack.c.h.b16 %v360
        %v588 = vunpack.c.l.b16 %v361
        %v589 = vunpack.c.h.b16 %v361
        %v590 = vunpack.c.l.b16 %v362
        %v591 = vunpack.c.h.b16 %v362
        %v592 = vunpack.c.l.b16 %v363
        %v593 = vunpack.c.h.b16 %v363
        %v594 = vunpack.c.l.b16 %v364
        %v595 = vunpack.c.h.b16 %v364
        %v596 = vunpack.c.l.b16 %v365
        %v597 = vunpack.c.h.b16 %v365
        %v598 = vunpack.c.l.b16 %v366
        %v599 = vunpack.c.h.b16 %v366
        %v600 = vunpack.c.l.b16 %v367
        %v601 = vunpack.c.h.b16 %v367
        %v602 = vunpack.c.l.b16 %v368
        %v603 = vunpack.c.h.b16 %v368
        %v604 = vunpack.c.l.b16 %v369
        %v605 = vunpack.c.h.b16 %v369
        %v606 = vunpack.c.l.b16 %v370
        %v607 = vunpack.c.h.b16 %v370
        %v608 = vunpack.c.l.b16 %v371
        %v609 = vunpack.c.h.b16 %v371
        %v610 = vunpack.c.l.b16 %v372
        %v611 = vunpack.c.h.b16 %v372
        %v612 = vunpack.c.l.b16 %v373
        %v613 = vunpack.c.h.b16 %v373
        %v614 = vunpack.c.l.b16 %v374
        %v615 = vunpack.c.h.b16 %v374
        %v616 = vunpack.c.l.b16 %v375
        %v617 = vunpack.c.h.b16 %v375
        %v618 = vunpack.c.l.b16 %v376
        %v619 = vunpack.c.h.b16 %v376
        %v620 = vunpack.c.l.b16 %v377
        %v621 = vunpack.c.h.b16 %v377
        %v622 = vunpack.c.l.b16 %v378
        %v623 = vunpack.c.h.b16 %v378
        %v624 = vunpack.c.l.b16 %v379
        %v625 = vunpack.c.h.b16 %v379
        %v626 = vunpack.c.l.b16 %v380
        %v627 = vunpack.c.h.b16 %v380
        %v628 = vunpack.c.l.b16 %v381
        %v629 = vunpack.c.h.b16 %v381
        %v630 = vunpack.c.l.b16 %v382
        %v631 = vunpack.c.h.b16 %v382
        %v632 = vunpack.c.l.b16 %v383
        %v633 = vunpack.c.h.b16 %v383
        %v634 = vunpack.c.l.b16 %v384
        %v635 = vunpack.c.h.b16 %v384
        %v636 = vunpack.c.l.b16 %v385
        %v637 = vunpack.c.h.b16 %v385
        %v638 = vunpack.c.l.b16 %v386
        %v639 = vunpack.c.h.b16 %v386
        %v640 = vunpack.c.l.b16 %v387
        %v641 = vunpack.c.h.b16 %v387
        %v642 = vunpack.c.l.b16 %v388
        %v643 = vunpack.c.h.b16 %v388
        %v644 = vunpack.c.l.b16 %v389
        %v645 = vunpack.c.h.b16 %v389
        %v646 = vunpack.c.l.b16 %v390
        %v647 = vunpack.c.h.b16 %v390
        %v648 = vunpack.c.l.b16 %v391
        %v649 = vunpack.c.h.b16 %v391
        %v650 = vunpack.c.l.b16 %v392
        %v651 = vunpack.c.h.b16 %v392
        %v652 = vunpack.c.l.b16 %v393
        %v653 = vunpack.c.h.b16 %v393
        %v654 = vunpack.c.l.b16 %v394
        %v655 = vunpack.c.h.b16 %v394
        %v656 = vunpack.c.l.b16 %v395
        %v657 = vunpack.c.h.b16 %v395
        %v658 = vunpack.c.l.b16 %v396
        %v659 = vunpack.c.h.b16 %v396
        %v660 = vunpack.c.l.b16 %v397
        %v661 = vunpack.c.h.b16 %v397
        %v662 = vunpack.c.l.b16 %v398
        %v663 = vunpack.c.h.b16 %v398
        %v664 = vunpack.c.l.b16 %v399
        %v665 = vunpack.c.h.b16 %v399
        %v666 = vunpack.c.l.b16 %v400
        %v667 = vunpack.c.h.b16 %v400
        %v668 = vunpack.c.l.b16 %v401
        %v669 = vunpack.c.h.b16 %v401
        %v670 = vunpack.c.l.b16 %v402
        %v671 = vunpack.c.h.b16 %v402
        %v672 = vunpack.c.l.b16 %v403
        %v673 = vunpack.c.h.b16 %v403
        %v674 = vunpack.c.l.b16 %v404
        %v675 = vunpack.c.h.b16 %v404
        %v676 = vunpack.c.l.b16 %v405
        %v677 = vunpack.c.h.b16 %v405
        %v678 = vpack.c.b16 %v554, %v550
        %v679 = vpack.c.b16 %v555, %v551
        %v680 = vpack.c.b16 %v556, %v552
        %v681 = vpack.c.b16 %v557, %v553
        %v682 = vpack.c.b16 %v562, %v558
        %v683 = vpack.c.b16 %v563, %v559
        %v684 = vpack.c.b16 %v564, %v560
        %v685 = vpack.c.b16 %v565, %v561
        %v686 = vpack.c.b16 %v570, %v566
        %v687 = vpack.c.b16 %v571, %v567
        %v688 = vpack.c.b16 %v572, %v568
        %v689 = vpack.c.b16 %v573, %v569
        %v690 = vpack.c.b16 %v578, %v574
        %v691 = vpack.c.b16 %v579, %v575
        %v692 = vpack.c.b16 %v580, %v576
        %v693 = vpack.c.b16 %v581, %v577
        %v694 = vpack.c.b16 %v586, %v582
        %v695 = vpack.c.b16 %v587, %v583
        %v696 = vpack.c.b16 %v588, %v584
        %v697 = vpack.c.b16 %v589, %v585
        %v698 = vpack.c.b16 %v594, %v590
        %v699 = vpack.c.b16 %v595, %v591
        %v700 = vpack.c.b16 %v596, %v592
        %v701 = vpack.c.b16 %v597, %v593
        %v702 = vpack.c.b16 %v602, %v598
        %v703 = vpack.c.b16 %v603, %v599
        %v704 = vpack.c.b16 %v604, %v600
        %v705 = vpack.c.b16 %v605, %v601
        %v706 = vpack.c.b16 %v610, %v606
        %v707 = vpack.c.b16 %v611, %v607
        %v708 = vpack.c.b16 %v612, %v608
        %v709 = vpack.c.b16 %v613, %v609
        %v710 = vpack.c.b16 %v618, %v614
        %v711 = vpack.c.b16 %v619, %v615
        %v712 = vpack.c.b16 %v620, %v616
        %v713 = vpack.c.b16 %v621, %v617
        %v714 = vpack.c.b16 %v626, %v622
        %v715 = vpack.c.b16 %v627, %v623
        %v716 = vpack.c.b16 %v628, %v624
        %v717 = vpack.c.b16 %v629, %v625
        %v718 = vpack.c.b16 %v634, %v630
        %v719 = vpack.c.b16 %v635, %v631
        %v720 = vpack.c.b16 %v636, %v632
        %v721 = vpack.c.b16 %v637, %v633
        %v722 = vpack.c.b16 %v642, %v638
        %v723 = vpack.c.b16 %v643, %v639
        %v724 = vpack.c.b16 %v644, %v640
        %v725 = vpack.c.b16 %v645, %v641
        %v726 = vpack.c.b16 %v650, %v646
        %v727 = vpack.c.b16 %v651, %v647
        %v728 = vpack.c.b16 %v652, %v648
        %v729 = vpack.c.b16 %v653, %v649
        %v730 = vpack.c.b16 %v658, %v654
        %v731 = vpack.c.b16 %v659, %v655
        %v732 = vpack.c.b16 %v660, %v656
        %v733 = vpack.c.b16 %v661, %v657
        %v734 = vpack.c.b16 %v666, %v662
        %v735 = vpack.c.b16 %v667, %v663
        %v736 = vpack.c.b16 %v668, %v664
        %v737 = vpack.c.b16 %v669, %v665
        %v738 = vpack.c.b16 %v674, %v670
        %v739 = vpack.c.b16 %v675, %v671
        %v740 = vpack.c.b16 %v676, %v672
        %v741 = vpack.c.b16 %v677, %v673
        %806 = vmatpush.bf16.msra.mxu0 %v706
        %807 = vmatpush.bf16.msra.mxu0 %v702
        %808 = vmatpush.bf16.msra.mxu0 %v698
        %809 = vmatpush.bf16.msra.mxu0 %v694
        %810 = vmatpush.bf16.msra.mxu0 %v690
        %811 = vmatpush.bf16.msra.mxu0 %v686
        %812 = vmatpush.bf16.msra.mxu0 %v682
        %813 = vmatpush.bf16.msra.mxu0 %v678
        %814 = vmatmul.bf16.gmra.mxu0 %v454
        %v815 = vpop.f32.mrf.mxu0
        %v816 = vadd.f32 0.0, %v815
        %v817 = vpop.f32.mrf.mxu0
        %v818 = vadd.f32 0.0, %v817
        %819 = vmatmul.bf16.gmra.mxu0 %v456
        %v820 = vpop.f32.mrf.mxu0
        %v821 = vadd.f32 0.0, %v820
        %v822 = vpop.f32.mrf.mxu0
        %v823 = vadd.f32 0.0, %v822
        %824 = vmatmul.bf16.gmra.mxu0 %v458
        %v825 = vpop.f32.mrf.mxu0
        %v826 = vadd.f32 0.0, %v825
        %v827 = vpop.f32.mrf.mxu0
        %v828 = vadd.f32 0.0, %v827
        %829 = vmatmul.bf16.gmra.mxu0 %v460
        %v830 = vpop.f32.mrf.mxu0
        %v831 = vadd.f32 0.0, %v830
        %v832 = vpop.f32.mrf.mxu0
        %v833 = vadd.f32 0.0, %v832
        %834 = vmatmul.bf16.gmra.mxu0 %v462
        %v835 = vpop.f32.mrf.mxu0
        %v836 = vadd.f32 0.0, %v835
        %v837 = vpop.f32.mrf.mxu0
        %v838 = vadd.f32 0.0, %v837
        %839 = vmatmul.bf16.gmra.mxu0 %v464
        %v840 = vpop.f32.mrf.mxu0
        %v841 = vadd.f32 0.0, %v840
        %v842 = vpop.f32.mrf.mxu0
        %v843 = vadd.f32 0.0, %v842
        %844 = vmatmul.bf16.gmra.mxu0 %v466
        %v845 = vpop.f32.mrf.mxu0
        %v846 = vadd.f32 0.0, %v845
        %v847 = vpop.f32.mrf.mxu0
        %v848 = vadd.f32 0.0, %v847
        %849 = vmatmul.bf16.gmra.mxu0 %v468
        %v850 = vpop.f32.mrf.mxu0
        %v851 = vadd.f32 0.0, %v850
        %v852 = vpop.f32.mrf.mxu0
        %v853 = vadd.f32 0.0, %v852
        %854 = vdwg.mxu0
        %855 = vmatpush.bf16.msra.mxu0 %v738
        %856 = vmatpush.bf16.msra.mxu0 %v734
        %857 = vmatpush.bf16.msra.mxu0 %v730
        %858 = vmatpush.bf16.msra.mxu0 %v726
        %859 = vmatpush.bf16.msra.mxu0 %v722
        %860 = vmatpush.bf16.msra.mxu0 %v718
        %861 = vmatpush.bf16.msra.mxu0 %v714
        %862 = vmatpush.bf16.msra.mxu0 %v710
        %863 = vmatmul.bf16.gmra.mxu0 %v455
        %v864 = vpop.f32.mrf.mxu0
        %v865 = vadd.f32 %v816, %v864
        %v866 = vpop.f32.mrf.mxu0
        %v867 = vadd.f32 %v818, %v866
        %868 = vmatmul.bf16.gmra.mxu0 %v457
        %v869 = vpop.f32.mrf.mxu0
        %v870 = vadd.f32 %v821, %v869
        %v871 = vpop.f32.mrf.mxu0
        %v872 = vadd.f32 %v823, %v871
        %873 = vmatmul.bf16.gmra.mxu0 %v459
        %v874 = vpop.f32.mrf.mxu0
        %v875 = vadd.f32 %v826, %v874
        %v876 = vpop.f32.mrf.mxu0
        %v877 = vadd.f32 %v828, %v876
        %878 = vmatmul.bf16.gmra.mxu0 %v461
        %v879 = vpop.f32.mrf.mxu0
        %v880 = vadd.f32 %v831, %v879
        %v881 = vpop.f32.mrf.mxu0
        %v882 = vadd.f32 %v833, %v881
        %883 = vmatmul.bf16.gmra.mxu0 %v463
        %v884 = vpop.f32.mrf.mxu0
        %v885 = vadd.f32 %v836, %v884
        %v886 = vpop.f32.mrf.mxu0
        %v887 = vadd.f32 %v838, %v886
        %888 = vmatmul.bf16.gmra.mxu0 %v465
        %v889 = vpop.f32.mrf.mxu0
        %v890 = vadd.f32 %v841, %v889
        %v891 = vpop.f32.mrf.mxu0
        %v892 = vadd.f32 %v843, %v891
        %893 = vmatmul.bf16.gmra.mxu0 %v467
        %v894 = vpop.f32.mrf.mxu0
        %v895 = vadd.f32 %v846, %v894
        %v896 = vpop.f32.mrf.mxu0
        %v897 = vadd.f32 %v848, %v896
        %898 = vmatmul.bf16.gmra.mxu0 %v469
        %v899 = vpop.f32.mrf.mxu0
        %v900 = vadd.f32 %v851, %v899
        %v901 = vpop.f32.mrf.mxu0
        %v902 = vadd.f32 %v853, %v901
        %903 = vdwg.mxu0
        %904 = vmatpush.bf16.msra.mxu0 %v707
        %905 = vmatpush.bf16.msra.mxu0 %v703
        %906 = vmatpush.bf16.msra.mxu0 %v699
        %907 = vmatpush.bf16.msra.mxu0 %v695
        %908 = vmatpush.bf16.msra.mxu0 %v691
        %909 = vmatpush.bf16.msra.mxu0 %v687
        %910 = vmatpush.bf16.msra.mxu0 %v683
        %911 = vmatpush.bf16.msra.mxu0 %v679
        %912 = vmatmul.bf16.gmra.mxu0 %v454
        %v913 = vpop.f32.mrf.mxu0
        %v914 = vadd.f32 0.0, %v913
        %v915 = vpop.f32.mrf.mxu0
        %v916 = vadd.f32 0.0, %v915
        %917 = vmatmul.bf16.gmra.mxu0 %v456
        %v918 = vpop.f32.mrf.mxu0
        %v919 = vadd.f32 0.0, %v918
        %v920 = vpop.f32.mrf.mxu0
        %v921 = vadd.f32 0.0, %v920
        %922 = vmatmul.bf16.gmra.mxu0 %v458
        %v923 = vpop.f32.mrf.mxu0
        %v924 = vadd.f32 0.0, %v923
        %v925 = vpop.f32.mrf.mxu0
        %v926 = vadd.f32 0.0, %v925
        %927 = vmatmul.bf16.gmra.mxu0 %v460
        %v928 = vpop.f32.mrf.mxu0
        %v929 = vadd.f32 0.0, %v928
        %v930 = vpop.f32.mrf.mxu0
        %v931 = vadd.f32 0.0, %v930
        %932 = vmatmul.bf16.gmra.mxu0 %v462
        %v933 = vpop.f32.mrf.mxu0
        %v934 = vadd.f32 0.0, %v933
        %v935 = vpop.f32.mrf.mxu0
        %v936 = vadd.f32 0.0, %v935
        %937 = vmatmul.bf16.gmra.mxu0 %v464
        %v938 = vpop.f32.mrf.mxu0
        %v939 = vadd.f32 0.0, %v938
        %v940 = vpop.f32.mrf.mxu0
        %v941 = vadd.f32 0.0, %v940
        %942 = vmatmul.bf16.gmra.mxu0 %v466
        %v943 = vpop.f32.mrf.mxu0
        %v944 = vadd.f32 0.0, %v943
        %v945 = vpop.f32.mrf.mxu0
        %v946 = vadd.f32 0.0, %v945
        %947 = vmatmul.bf16.gmra.mxu0 %v468
        %v948 = vpop.f32.mrf.mxu0
        %v949 = vadd.f32 0.0, %v948
        %v950 = vpop.f32.mrf.mxu0
        %v951 = vadd.f32 0.0, %v950
        %952 = vdwg.mxu0
        %953 = vmatpush.bf16.msra.mxu0 %v739
        %954 = vmatpush.bf16.msra.mxu0 %v735
        %955 = vmatpush.bf16.msra.mxu0 %v731
        %956 = vmatpush.bf16.msra.mxu0 %v727
        %957 = vmatpush.bf16.msra.mxu0 %v723
        %958 = vmatpush.bf16.msra.mxu0 %v719
        %959 = vmatpush.bf16.msra.mxu0 %v715
        %960 = vmatpush.bf16.msra.mxu0 %v711
        %961 = vmatmul.bf16.gmra.mxu0 %v455
        %v962 = vpop.f32.mrf.mxu0
        %v963 = vadd.f32 %v914, %v962
        %v964 = vpop.f32.mrf.mxu0
        %v965 = vadd.f32 %v916, %v964
        %966 = vmatmul.bf16.gmra.mxu0 %v457
        %v967 = vpop.f32.mrf.mxu0
        %v968 = vadd.f32 %v919, %v967
        %v969 = vpop.f32.mrf.mxu0
        %v970 = vadd.f32 %v921, %v969
        %971 = vmatmul.bf16.gmra.mxu0 %v459
        %v972 = vpop.f32.mrf.mxu0
        %v973 = vadd.f32 %v924, %v972
        %v974 = vpop.f32.mrf.mxu0
        %v975 = vadd.f32 %v926, %v974
        %976 = vmatmul.bf16.gmra.mxu0 %v461
        %v977 = vpop.f32.mrf.mxu0
        %v978 = vadd.f32 %v929, %v977
        %v979 = vpop.f32.mrf.mxu0
        %v980 = vadd.f32 %v931, %v979
        %981 = vmatmul.bf16.gmra.mxu0 %v463
        %v982 = vpop.f32.mrf.mxu0
        %v983 = vadd.f32 %v934, %v982
        %v984 = vpop.f32.mrf.mxu0
        %v985 = vadd.f32 %v936, %v984
        %986 = vmatmul.bf16.gmra.mxu0 %v465
        %v987 = vpop.f32.mrf.mxu0
        %v988 = vadd.f32 %v939, %v987
        %v989 = vpop.f32.mrf.mxu0
        %v990 = vadd.f32 %v941, %v989
        %991 = vmatmul.bf16.gmra.mxu0 %v467
        %v992 = vpop.f32.mrf.mxu0
        %v993 = vadd.f32 %v944, %v992
        %v994 = vpop.f32.mrf.mxu0
        %v995 = vadd.f32 %v946, %v994
        %996 = vmatmul.bf16.gmra.mxu0 %v469
        %v997 = vpop.f32.mrf.mxu0
        %v998 = vadd.f32 %v949, %v997
        %v999 = vpop.f32.mrf.mxu0
        %v1000 = vadd.f32 %v951, %v999
        %1001 = vdwg.mxu0
        %1002 = vmatpush.bf16.msra.mxu0 %v708
        %1003 = vmatpush.bf16.msra.mxu0 %v704
        %1004 = vmatpush.bf16.msra.mxu0 %v700
        %1005 = vmatpush.bf16.msra.mxu0 %v696
        %1006 = vmatpush.bf16.msra.mxu0 %v692
        %1007 = vmatpush.bf16.msra.mxu0 %v688
        %1008 = vmatpush.bf16.msra.mxu0 %v684
        %1009 = vmatpush.bf16.msra.mxu0 %v680
        %1010 = vmatmul.bf16.gmra.mxu0 %v454
        %v1011 = vpop.f32.mrf.mxu0
        %v1012 = vadd.f32 0.0, %v1011
        %v1013 = vpop.f32.mrf.mxu0
        %v1014 = vadd.f32 0.0, %v1013
        %1015 = vmatmul.bf16.gmra.mxu0 %v456
        %v1016 = vpop.f32.mrf.mxu0
        %v1017 = vadd.f32 0.0, %v1016
        %v1018 = vpop.f32.mrf.mxu0
        %v1019 = vadd.f32 0.0, %v1018
        %1020 = vmatmul.bf16.gmra.mxu0 %v458
        %v1021 = vpop.f32.mrf.mxu0
        %v1022 = vadd.f32 0.0, %v1021
        %v1023 = vpop.f32.mrf.mxu0
        %v1024 = vadd.f32 0.0, %v1023
        %1025 = vmatmul.bf16.gmra.mxu0 %v460
        %v1026 = vpop.f32.mrf.mxu0
        %v1027 = vadd.f32 0.0, %v1026
        %v1028 = vpop.f32.mrf.mxu0
        %v1029 = vadd.f32 0.0, %v1028
        %1030 = vmatmul.bf16.gmra.mxu0 %v462
        %v1031 = vpop.f32.mrf.mxu0
        %v1032 = vadd.f32 0.0, %v1031
        %v1033 = vpop.f32.mrf.mxu0
        %v1034 = vadd.f32 0.0, %v1033
        %1035 = vmatmul.bf16.gmra.mxu0 %v464
        %v1036 = vpop.f32.mrf.mxu0
        %v1037 = vadd.f32 0.0, %v1036
        %v1038 = vpop.f32.mrf.mxu0
        %v1039 = vadd.f32 0.0, %v1038
        %1040 = vmatmul.bf16.gmra.mxu0 %v466
        %v1041 = vpop.f32.mrf.mxu0
        %v1042 = vadd.f32 0.0, %v1041
        %v1043 = vpop.f32.mrf.mxu0
        %v1044 = vadd.f32 0.0, %v1043
        %1045 = vmatmul.bf16.gmra.mxu0 %v468
        %v1046 = vpop.f32.mrf.mxu0
        %v1047 = vadd.f32 0.0, %v1046
        %v1048 = vpop.f32.mrf.mxu0
        %v1049 = vadd.f32 0.0, %v1048
        %1050 = vdwg.mxu0
        %1051 = vmatpush.bf16.msra.mxu0 %v740
        %1052 = vmatpush.bf16.msra.mxu0 %v736
        %1053 = vmatpush.bf16.msra.mxu0 %v732
        %1054 = vmatpush.bf16.msra.mxu0 %v728
        %1055 = vmatpush.bf16.msra.mxu0 %v724
        %1056 = vmatpush.bf16.msra.mxu0 %v720
        %1057 = vmatpush.bf16.msra.mxu0 %v716
        %1058 = vmatpush.bf16.msra.mxu0 %v712
        %1059 = vmatmul.bf16.gmra.mxu0 %v455
        %v1060 = vpop.f32.mrf.mxu0
        %v1061 = vadd.f32 %v1012, %v1060
        %v1062 = vpop.f32.mrf.mxu0
        %v1063 = vadd.f32 %v1014, %v1062
        %1064 = vmatmul.bf16.gmra.mxu0 %v457
        %v1065 = vpop.f32.mrf.mxu0
        %v1066 = vadd.f32 %v1017, %v1065
        %v1067 = vpop.f32.mrf.mxu0
        %v1068 = vadd.f32 %v1019, %v1067
        %1069 = vmatmul.bf16.gmra.mxu0 %v459
        %v1070 = vpop.f32.mrf.mxu0
        %v1071 = vadd.f32 %v1022, %v1070
        %v1072 = vpop.f32.mrf.mxu0
        %v1073 = vadd.f32 %v1024, %v1072
        %1074 = vmatmul.bf16.gmra.mxu0 %v461
        %v1075 = vpop.f32.mrf.mxu0
        %v1076 = vadd.f32 %v1027, %v1075
        %v1077 = vpop.f32.mrf.mxu0
        %v1078 = vadd.f32 %v1029, %v1077
        %1079 = vmatmul.bf16.gmra.mxu0 %v463
        %v1080 = vpop.f32.mrf.mxu0
        %v1081 = vadd.f32 %v1032, %v1080
        %v1082 = vpop.f32.mrf.mxu0
        %v1083 = vadd.f32 %v1034, %v1082
        %1084 = vmatmul.bf16.gmra.mxu0 %v465
        %v1085 = vpop.f32.mrf.mxu0
        %v1086 = vadd.f32 %v1037, %v1085
        %v1087 = vpop.f32.mrf.mxu0
        %v1088 = vadd.f32 %v1039, %v1087
        %1089 = vmatmul.bf16.gmra.mxu0 %v467
        %v1090 = vpop.f32.mrf.mxu0
        %v1091 = vadd.f32 %v1042, %v1090
        %v1092 = vpop.f32.mrf.mxu0
        %v1093 = vadd.f32 %v1044, %v1092
        %1094 = vmatmul.bf16.gmra.mxu0 %v469
        %v1095 = vpop.f32.mrf.mxu0
        %v1096 = vadd.f32 %v1047, %v1095
        %v1097 = vpop.f32.mrf.mxu0
        %v1098 = vadd.f32 %v1049, %v1097
        %1099 = vdwg.mxu0
        %1100 = vmatpush.bf16.msra.mxu0 %v709
        %1101 = vmatpush.bf16.msra.mxu0 %v705
        %1102 = vmatpush.bf16.msra.mxu0 %v701
        %1103 = vmatpush.bf16.msra.mxu0 %v697
        %1104 = vmatpush.bf16.msra.mxu0 %v693
        %1105 = vmatpush.bf16.msra.mxu0 %v689
        %1106 = vmatpush.bf16.msra.mxu0 %v685
        %1107 = vmatpush.bf16.msra.mxu0 %v681
        %1108 = vmatmul.bf16.gmra.mxu0 %v454
        %v1109 = vpop.f32.mrf.mxu0
        %v1110 = vadd.f32 0.0, %v1109
        %v1111 = vpop.f32.mrf.mxu0
        %v1112 = vadd.f32 0.0, %v1111
        %1113 = vmatmul.bf16.gmra.mxu0 %v456
        %v1114 = vpop.f32.mrf.mxu0
        %v1115 = vadd.f32 0.0, %v1114
        %v1116 = vpop.f32.mrf.mxu0
        %v1117 = vadd.f32 0.0, %v1116
        %1118 = vmatmul.bf16.gmra.mxu0 %v458
        %v1119 = vpop.f32.mrf.mxu0
        %v1120 = vadd.f32 0.0, %v1119
        %v1121 = vpop.f32.mrf.mxu0
        %v1122 = vadd.f32 0.0, %v1121
        %1123 = vmatmul.bf16.gmra.mxu0 %v460
        %v1124 = vpop.f32.mrf.mxu0
        %v1125 = vadd.f32 0.0, %v1124
        %v1126 = vpop.f32.mrf.mxu0
        %v1127 = vadd.f32 0.0, %v1126
        %1128 = vmatmul.bf16.gmra.mxu0 %v462
        %v1129 = vpop.f32.mrf.mxu0
        %v1130 = vadd.f32 0.0, %v1129
        %v1131 = vpop.f32.mrf.mxu0
        %v1132 = vadd.f32 0.0, %v1131
        %1133 = vmatmul.bf16.gmra.mxu0 %v464
        %v1134 = vpop.f32.mrf.mxu0
        %v1135 = vadd.f32 0.0, %v1134
        %v1136 = vpop.f32.mrf.mxu0
        %v1137 = vadd.f32 0.0, %v1136
        %1138 = vmatmul.bf16.gmra.mxu0 %v466
        %v1139 = vpop.f32.mrf.mxu0
        %v1140 = vadd.f32 0.0, %v1139
        %v1141 = vpop.f32.mrf.mxu0
        %v1142 = vadd.f32 0.0, %v1141
        %1143 = vmatmul.bf16.gmra.mxu0 %v468
        %v1144 = vpop.f32.mrf.mxu0
        %v1145 = vadd.f32 0.0, %v1144
        %v1146 = vpop.f32.mrf.mxu0
        %v1147 = vadd.f32 0.0, %v1146
        %1148 = vdwg.mxu0
        %1149 = vmatpush.bf16.msra.mxu0 %v741
        %1150 = vmatpush.bf16.msra.mxu0 %v737
        %1151 = vmatpush.bf16.msra.mxu0 %v733
        %1152 = vmatpush.bf16.msra.mxu0 %v729
        %1153 = vmatpush.bf16.msra.mxu0 %v725
        %1154 = vmatpush.bf16.msra.mxu0 %v721
        %1155 = vmatpush.bf16.msra.mxu0 %v717
        %1156 = vmatpush.bf16.msra.mxu0 %v713
        %1157 = vmatmul.bf16.gmra.mxu0 %v455
        %v1158 = vpop.f32.mrf.mxu0
        %v1159 = vadd.f32 %v1110, %v1158
        %v1160 = vpop.f32.mrf.mxu0
        %v1161 = vadd.f32 %v1112, %v1160
        %1162 = vmatmul.bf16.gmra.mxu0 %v457
        %v1163 = vpop.f32.mrf.mxu0
        %v1164 = vadd.f32 %v1115, %v1163
        %v1165 = vpop.f32.mrf.mxu0
        %v1166 = vadd.f32 %v1117, %v1165
        %1167 = vmatmul.bf16.gmra.mxu0 %v459
        %v1168 = vpop.f32.mrf.mxu0
        %v1169 = vadd.f32 %v1120, %v1168
        %v1170 = vpop.f32.mrf.mxu0
        %v1171 = vadd.f32 %v1122, %v1170
        %1172 = vmatmul.bf16.gmra.mxu0 %v461
        %v1173 = vpop.f32.mrf.mxu0
        %v1174 = vadd.f32 %v1125, %v1173
        %v1175 = vpop.f32.mrf.mxu0
        %v1176 = vadd.f32 %v1127, %v1175
        %1177 = vmatmul.bf16.gmra.mxu0 %v463
        %v1178 = vpop.f32.mrf.mxu0
        %v1179 = vadd.f32 %v1130, %v1178
        %v1180 = vpop.f32.mrf.mxu0
        %v1181 = vadd.f32 %v1132, %v1180
        %1182 = vmatmul.bf16.gmra.mxu0 %v465
        %v1183 = vpop.f32.mrf.mxu0
        %v1184 = vadd.f32 %v1135, %v1183
        %v1185 = vpop.f32.mrf.mxu0
        %v1186 = vadd.f32 %v1137, %v1185
        %1187 = vmatmul.bf16.gmra.mxu0 %v467
        %v1188 = vpop.f32.mrf.mxu0
        %v1189 = vadd.f32 %v1140, %v1188
        %v1190 = vpop.f32.mrf.mxu0
        %v1191 = vadd.f32 %v1142, %v1190
        %1192 = vmatmul.bf16.gmra.mxu0 %v469
        %v1193 = vpop.f32.mrf.mxu0
        %v1194 = vadd.f32 %v1145, %v1193
        %v1195 = vpop.f32.mrf.mxu0
        %v1196 = vadd.f32 %v1147, %v1195
        %1197 = vdwg.mxu0
        %v1198 = vxor.u32 %v865, 2147483648
        %v1199 = vxor.u32 %v963, 2147483648
        %v1200 = vxor.u32 %v867, 2147483648
        %v1201 = vxor.u32 %v965, 2147483648
        %v1202 = vxor.u32 %v870, 2147483648
        %v1203 = vxor.u32 %v968, 2147483648
        %v1204 = vxor.u32 %v872, 2147483648
        %v1205 = vxor.u32 %v970, 2147483648
        %v1206 = vxor.u32 %v875, 2147483648
        %v1207 = vxor.u32 %v973, 2147483648
        %v1208 = vxor.u32 %v877, 2147483648
        %v1209 = vxor.u32 %v975, 2147483648
        %v1210 = vxor.u32 %v880, 2147483648
        %v1211 = vxor.u32 %v978, 2147483648
        %v1212 = vxor.u32 %v882, 2147483648
        %v1213 = vxor.u32 %v980, 2147483648
        %v1214 = vxor.u32 %v885, 2147483648
        %v1215 = vxor.u32 %v983, 2147483648
        %v1216 = vxor.u32 %v887, 2147483648
        %v1217 = vxor.u32 %v985, 2147483648
        %v1218 = vxor.u32 %v890, 2147483648
        %v1219 = vxor.u32 %v988, 2147483648
        %v1220 = vxor.u32 %v892, 2147483648
        %v1221 = vxor.u32 %v990, 2147483648
        %v1222 = vxor.u32 %v895, 2147483648
        %v1223 = vxor.u32 %v993, 2147483648
        %v1224 = vxor.u32 %v897, 2147483648
        %v1225 = vxor.u32 %v995, 2147483648
        %v1226 = vxor.u32 %v900, 2147483648
        %v1227 = vxor.u32 %v998, 2147483648
        %v1228 = vxor.u32 %v902, 2147483648
        %v1229 = vxor.u32 %v1000, 2147483648
        %v1230 = vmul.f32 %v1198, 1.442695
        %v1231 = vpow.pop %v1230
        %v1232 = vmul.f32 %v1199, 1.442695
        %v1233 = vpow.pop %v1232
        %v1234 = vmul.f32 %v1200, 1.442695
        %v1235 = vpow.pop %v1234
        %v1236 = vmul.f32 %v1201, 1.442695
        %v1237 = vpow.pop %v1236
        %v1238 = vmul.f32 %v1202, 1.442695
        %v1239 = vpow.pop %v1238
        %v1240 = vmul.f32 %v1203, 1.442695
        %v1241 = vpow.pop %v1240
        %v1242 = vmul.f32 %v1204, 1.442695
        %v1243 = vpow.pop %v1242
        %v1244 = vmul.f32 %v1205, 1.442695
        %v1245 = vpow.pop %v1244
        %v1246 = vmul.f32 %v1206, 1.442695
        %v1247 = vpow.pop %v1246
        %v1248 = vmul.f32 %v1207, 1.442695
        %v1249 = vpow.pop %v1248
        %v1250 = vmul.f32 %v1208, 1.442695
        %v1251 = vpow.pop %v1250
        %v1252 = vmul.f32 %v1209, 1.442695
        %v1253 = vpow.pop %v1252
        %v1254 = vmul.f32 %v1210, 1.442695
        %v1255 = vpow.pop %v1254
        %v1256 = vmul.f32 %v1211, 1.442695
        %v1257 = vpow.pop %v1256
        %v1258 = vmul.f32 %v1212, 1.442695
        %v1259 = vpow.pop %v1258
        %v1260 = vmul.f32 %v1213, 1.442695
        %v1261 = vpow.pop %v1260
        %v1262 = vmul.f32 %v1214, 1.442695
        %v1263 = vpow.pop %v1262
        %v1264 = vmul.f32 %v1215, 1.442695
        %v1265 = vpow.pop %v1264
        %v1266 = vmul.f32 %v1216, 1.442695
        %v1267 = vpow.pop %v1266
        %v1268 = vmul.f32 %v1217, 1.442695
        %v1269 = vpow.pop %v1268
        %v1270 = vmul.f32 %v1218, 1.442695
        %v1271 = vpow.pop %v1270
        %v1272 = vmul.f32 %v1219, 1.442695
        %v1273 = vpow.pop %v1272
        %v1274 = vmul.f32 %v1220, 1.442695
        %v1275 = vpow.pop %v1274
        %v1276 = vmul.f32 %v1221, 1.442695
        %v1277 = vpow.pop %v1276
        %v1278 = vmul.f32 %v1222, 1.442695
        %v1279 = vpow.pop %v1278
        %v1280 = vmul.f32 %v1223, 1.442695
        %v1281 = vpow.pop %v1280
        %v1282 = vmul.f32 %v1224, 1.442695
        %v1283 = vpow.pop %v1282
        %v1284 = vmul.f32 %v1225, 1.442695
        %v1285 = vpow.pop %v1284
        %v1286 = vmul.f32 %v1226, 1.442695
        %v1287 = vpow.pop %v1286
        %v1288 = vmul.f32 %v1227, 1.442695
        %v1289 = vpow.pop %v1288
        %v1290 = vmul.f32 %v1228, 1.442695
        %v1291 = vpow.pop %v1290
        %v1292 = vmul.f32 %v1229, 1.442695
        %v1293 = vpow.pop %v1292
        %v1294 = vadd.f32 %v1231, 1.0
        %v1295 = vadd.f32 %v1233, 1.0
        %v1296 = vadd.f32 %v1235, 1.0
        %v1297 = vadd.f32 %v1237, 1.0
        %v1298 = vadd.f32 %v1239, 1.0
        %v1299 = vadd.f32 %v1241, 1.0
        %v1300 = vadd.f32 %v1243, 1.0
        %v1301 = vadd.f32 %v1245, 1.0
        %v1302 = vadd.f32 %v1247, 1.0
        %v1303 = vadd.f32 %v1249, 1.0
        %v1304 = vadd.f32 %v1251, 1.0
        %v1305 = vadd.f32 %v1253, 1.0
        %v1306 = vadd.f32 %v1255, 1.0
        %v1307 = vadd.f32 %v1257, 1.0
        %v1308 = vadd.f32 %v1259, 1.0
        %v1309 = vadd.f32 %v1261, 1.0
        %v1310 = vadd.f32 %v1263, 1.0
        %v1311 = vadd.f32 %v1265, 1.0
        %v1312 = vadd.f32 %v1267, 1.0
        %v1313 = vadd.f32 %v1269, 1.0
        %v1314 = vadd.f32 %v1271, 1.0
        %v1315 = vadd.f32 %v1273, 1.0
        %v1316 = vadd.f32 %v1275, 1.0
        %v1317 = vadd.f32 %v1277, 1.0
        %v1318 = vadd.f32 %v1279, 1.0
        %v1319 = vadd.f32 %v1281, 1.0
        %v1320 = vadd.f32 %v1283, 1.0
        %v1321 = vadd.f32 %v1285, 1.0
        %v1322 = vadd.f32 %v1287, 1.0
        %v1323 = vadd.f32 %v1289, 1.0
        %v1324 = vadd.f32 %v1291, 1.0
        %v1325 = vadd.f32 %v1293, 1.0
        %v1326 = vrcp.pop %v1294
        %v1327 = vmul.f32 %v1294, %v1326
        %v1328 = vsub.f32 1.0, %v1327
        %v1329 = vmul.f32 %v1326, %v1328
        %v1330 = vadd.f32 %v1326, %v1329
        %vm1331 = vweird.f32 %v1294
        %vm1332 = vweird.f32 %v1326
        %vm1333 = vmor %vm1331, %vm1332
        %v1334 = vsel %vm1333, %v1326, %v1330
        %v1335 = vand.u32 2147483647, %v1294
        %vm1336 = vcmp.eq.f32.partialorder %v1335, 8.507059e+37
        %v1337 = vand.u32 %v1294, 2147483648
        %v1338 = vor.u32 1.1754944e-38, %v1337
        %v1339 = vsel %vm1336, %v1338, %v1334
        %v1340 = vmul.f32 1.0, %v1339
        %v1341 = vrcp.pop %v1295
        %v1342 = vmul.f32 %v1295, %v1341
        %v1343 = vsub.f32 1.0, %v1342
        %v1344 = vmul.f32 %v1341, %v1343
        %v1345 = vadd.f32 %v1341, %v1344
        %vm1346 = vweird.f32 %v1295
        %vm1347 = vweird.f32 %v1341
        %vm1348 = vmor %vm1346, %vm1347
        %v1349 = vsel %vm1348, %v1341, %v1345
        %v1350 = vand.u32 2147483647, %v1295
        %vm1351 = vcmp.eq.f32.partialorder %v1350, 8.507059e+37
        %v1352 = vand.u32 %v1295, 2147483648
        %v1353 = vor.u32 1.1754944e-38, %v1352
        %v1354 = vsel %vm1351, %v1353, %v1349
        %v1355 = vmul.f32 1.0, %v1354
        %v1356 = vrcp.pop %v1296
        %v1357 = vmul.f32 %v1296, %v1356
        %v1358 = vsub.f32 1.0, %v1357
        %v1359 = vmul.f32 %v1356, %v1358
        %v1360 = vadd.f32 %v1356, %v1359
        %vm1361 = vweird.f32 %v1296
        %vm1362 = vweird.f32 %v1356
        %vm1363 = vmor %vm1361, %vm1362
        %v1364 = vsel %vm1363, %v1356, %v1360
        %v1365 = vand.u32 2147483647, %v1296
        %vm1366 = vcmp.eq.f32.partialorder %v1365, 8.507059e+37
        %v1367 = vand.u32 %v1296, 2147483648
        %v1368 = vor.u32 1.1754944e-38, %v1367
        %v1369 = vsel %vm1366, %v1368, %v1364
        %v1370 = vmul.f32 1.0, %v1369
        %v1371 = vrcp.pop %v1297
        %v1372 = vmul.f32 %v1297, %v1371
        %v1373 = vsub.f32 1.0, %v1372
        %v1374 = vmul.f32 %v1371, %v1373
        %v1375 = vadd.f32 %v1371, %v1374
        %vm1376 = vweird.f32 %v1297
        %vm1377 = vweird.f32 %v1371
        %vm1378 = vmor %vm1376, %vm1377
        %v1379 = vsel %vm1378, %v1371, %v1375
        %v1380 = vand.u32 2147483647, %v1297
        %vm1381 = vcmp.eq.f32.partialorder %v1380, 8.507059e+37
        %v1382 = vand.u32 %v1297, 2147483648
        %v1383 = vor.u32 1.1754944e-38, %v1382
        %v1384 = vsel %vm1381, %v1383, %v1379
        %v1385 = vmul.f32 1.0, %v1384
        %v1386 = vrcp.pop %v1298
        %v1387 = vmul.f32 %v1298, %v1386
        %v1388 = vsub.f32 1.0, %v1387
        %v1389 = vmul.f32 %v1386, %v1388
        %v1390 = vadd.f32 %v1386, %v1389
        %vm1391 = vweird.f32 %v1298
        %vm1392 = vweird.f32 %v1386
        %vm1393 = vmor %vm1391, %vm1392
        %v1394 = vsel %vm1393, %v1386, %v1390
        %v1395 = vand.u32 2147483647, %v1298
        %vm1396 = vcmp.eq.f32.partialorder %v1395, 8.507059e+37
        %v1397 = vand.u32 %v1298, 2147483648
        %v1398 = vor.u32 1.1754944e-38, %v1397
        %v1399 = vsel %vm1396, %v1398, %v1394
        %v1400 = vmul.f32 1.0, %v1399
        %v1401 = vrcp.pop %v1299
        %v1402 = vmul.f32 %v1299, %v1401
        %v1403 = vsub.f32 1.0, %v1402
        %v1404 = vmul.f32 %v1401, %v1403
        %v1405 = vadd.f32 %v1401, %v1404
        %vm1406 = vweird.f32 %v1299
        %vm1407 = vweird.f32 %v1401
        %vm1408 = vmor %vm1406, %vm1407
        %v1409 = vsel %vm1408, %v1401, %v1405
        %v1410 = vand.u32 2147483647, %v1299
        %vm1411 = vcmp.eq.f32.partialorder %v1410, 8.507059e+37
        %v1412 = vand.u32 %v1299, 2147483648
        %v1413 = vor.u32 1.1754944e-38, %v1412
        %v1414 = vsel %vm1411, %v1413, %v1409
        %v1415 = vmul.f32 1.0, %v1414
        %v1416 = vrcp.pop %v1300
        %v1417 = vmul.f32 %v1300, %v1416
        %v1418 = vsub.f32 1.0, %v1417
        %v1419 = vmul.f32 %v1416, %v1418
        %v1420 = vadd.f32 %v1416, %v1419
        %vm1421 = vweird.f32 %v1300
        %vm1422 = vweird.f32 %v1416
        %vm1423 = vmor %vm1421, %vm1422
        %v1424 = vsel %vm1423, %v1416, %v1420
        %v1425 = vand.u32 2147483647, %v1300
        %vm1426 = vcmp.eq.f32.partialorder %v1425, 8.507059e+37
        %v1427 = vand.u32 %v1300, 2147483648
        %v1428 = vor.u32 1.1754944e-38, %v1427
        %v1429 = vsel %vm1426, %v1428, %v1424
        %v1430 = vmul.f32 1.0, %v1429
        %v1431 = vrcp.pop %v1301
        %v1432 = vmul.f32 %v1301, %v1431
        %v1433 = vsub.f32 1.0, %v1432
        %v1434 = vmul.f32 %v1431, %v1433
        %v1435 = vadd.f32 %v1431, %v1434
        %vm1436 = vweird.f32 %v1301
        %vm1437 = vweird.f32 %v1431
        %vm1438 = vmor %vm1436, %vm1437
        %v1439 = vsel %vm1438, %v1431, %v1435
        %v1440 = vand.u32 2147483647, %v1301
        %vm1441 = vcmp.eq.f32.partialorder %v1440, 8.507059e+37
        %v1442 = vand.u32 %v1301, 2147483648
        %v1443 = vor.u32 1.1754944e-38, %v1442
        %v1444 = vsel %vm1441, %v1443, %v1439
        %v1445 = vmul.f32 1.0, %v1444
        %v1446 = vrcp.pop %v1302
        %v1447 = vmul.f32 %v1302, %v1446
        %v1448 = vsub.f32 1.0, %v1447
        %v1449 = vmul.f32 %v1446, %v1448
        %v1450 = vadd.f32 %v1446, %v1449
        %vm1451 = vweird.f32 %v1302
        %vm1452 = vweird.f32 %v1446
        %vm1453 = vmor %vm1451, %vm1452
        %v1454 = vsel %vm1453, %v1446, %v1450
        %v1455 = vand.u32 2147483647, %v1302
        %vm1456 = vcmp.eq.f32.partialorder %v1455, 8.507059e+37
        %v1457 = vand.u32 %v1302, 2147483648
        %v1458 = vor.u32 1.1754944e-38, %v1457
        %v1459 = vsel %vm1456, %v1458, %v1454
        %v1460 = vmul.f32 1.0, %v1459
        %v1461 = vrcp.pop %v1303
        %v1462 = vmul.f32 %v1303, %v1461
        %v1463 = vsub.f32 1.0, %v1462
        %v1464 = vmul.f32 %v1461, %v1463
        %v1465 = vadd.f32 %v1461, %v1464
        %vm1466 = vweird.f32 %v1303
        %vm1467 = vweird.f32 %v1461
        %vm1468 = vmor %vm1466, %vm1467
        %v1469 = vsel %vm1468, %v1461, %v1465
        %v1470 = vand.u32 2147483647, %v1303
        %vm1471 = vcmp.eq.f32.partialorder %v1470, 8.507059e+37
        %v1472 = vand.u32 %v1303, 2147483648
        %v1473 = vor.u32 1.1754944e-38, %v1472
        %v1474 = vsel %vm1471, %v1473, %v1469
        %v1475 = vmul.f32 1.0, %v1474
        %v1476 = vrcp.pop %v1304
        %v1477 = vmul.f32 %v1304, %v1476
        %v1478 = vsub.f32 1.0, %v1477
        %v1479 = vmul.f32 %v1476, %v1478
        %v1480 = vadd.f32 %v1476, %v1479
        %vm1481 = vweird.f32 %v1304
        %vm1482 = vweird.f32 %v1476
        %vm1483 = vmor %vm1481, %vm1482
        %v1484 = vsel %vm1483, %v1476, %v1480
        %v1485 = vand.u32 2147483647, %v1304
        %vm1486 = vcmp.eq.f32.partialorder %v1485, 8.507059e+37
        %v1487 = vand.u32 %v1304, 2147483648
        %v1488 = vor.u32 1.1754944e-38, %v1487
        %v1489 = vsel %vm1486, %v1488, %v1484
        %v1490 = vmul.f32 1.0, %v1489
        %v1491 = vrcp.pop %v1305
        %v1492 = vmul.f32 %v1305, %v1491
        %v1493 = vsub.f32 1.0, %v1492
        %v1494 = vmul.f32 %v1491, %v1493
        %v1495 = vadd.f32 %v1491, %v1494
        %vm1496 = vweird.f32 %v1305
        %vm1497 = vweird.f32 %v1491
        %vm1498 = vmor %vm1496, %vm1497
        %v1499 = vsel %vm1498, %v1491, %v1495
        %v1500 = vand.u32 2147483647, %v1305
        %vm1501 = vcmp.eq.f32.partialorder %v1500, 8.507059e+37
        %v1502 = vand.u32 %v1305, 2147483648
        %v1503 = vor.u32 1.1754944e-38, %v1502
        %v1504 = vsel %vm1501, %v1503, %v1499
        %v1505 = vmul.f32 1.0, %v1504
        %v1506 = vrcp.pop %v1306
        %v1507 = vmul.f32 %v1306, %v1506
        %v1508 = vsub.f32 1.0, %v1507
        %v1509 = vmul.f32 %v1506, %v1508
        %v1510 = vadd.f32 %v1506, %v1509
        %vm1511 = vweird.f32 %v1306
        %vm1512 = vweird.f32 %v1506
        %vm1513 = vmor %vm1511, %vm1512
        %v1514 = vsel %vm1513, %v1506, %v1510
        %v1515 = vand.u32 2147483647, %v1306
        %vm1516 = vcmp.eq.f32.partialorder %v1515, 8.507059e+37
        %v1517 = vand.u32 %v1306, 2147483648
        %v1518 = vor.u32 1.1754944e-38, %v1517
        %v1519 = vsel %vm1516, %v1518, %v1514
        %v1520 = vmul.f32 1.0, %v1519
        %v1521 = vrcp.pop %v1307
        %v1522 = vmul.f32 %v1307, %v1521
        %v1523 = vsub.f32 1.0, %v1522
        %v1524 = vmul.f32 %v1521, %v1523
        %v1525 = vadd.f32 %v1521, %v1524
        %vm1526 = vweird.f32 %v1307
        %vm1527 = vweird.f32 %v1521
        %vm1528 = vmor %vm1526, %vm1527
        %v1529 = vsel %vm1528, %v1521, %v1525
        %v1530 = vand.u32 2147483647, %v1307
        %vm1531 = vcmp.eq.f32.partialorder %v1530, 8.507059e+37
        %v1532 = vand.u32 %v1307, 2147483648
        %v1533 = vor.u32 1.1754944e-38, %v1532
        %v1534 = vsel %vm1531, %v1533, %v1529
        %v1535 = vmul.f32 1.0, %v1534
        %v1536 = vrcp.pop %v1308
        %v1537 = vmul.f32 %v1308, %v1536
        %v1538 = vsub.f32 1.0, %v1537
        %v1539 = vmul.f32 %v1536, %v1538
        %v1540 = vadd.f32 %v1536, %v1539
        %vm1541 = vweird.f32 %v1308
        %vm1542 = vweird.f32 %v1536
        %vm1543 = vmor %vm1541, %vm1542
        %v1544 = vsel %vm1543, %v1536, %v1540
        %v1545 = vand.u32 2147483647, %v1308
        %vm1546 = vcmp.eq.f32.partialorder %v1545, 8.507059e+37
        %v1547 = vand.u32 %v1308, 2147483648
        %v1548 = vor.u32 1.1754944e-38, %v1547
        %v1549 = vsel %vm1546, %v1548, %v1544
        %v1550 = vmul.f32 1.0, %v1549
        %v1551 = vrcp.pop %v1309
        %v1552 = vmul.f32 %v1309, %v1551
        %v1553 = vsub.f32 1.0, %v1552
        %v1554 = vmul.f32 %v1551, %v1553
        %v1555 = vadd.f32 %v1551, %v1554
        %vm1556 = vweird.f32 %v1309
        %vm1557 = vweird.f32 %v1551
        %vm1558 = vmor %vm1556, %vm1557
        %v1559 = vsel %vm1558, %v1551, %v1555
        %v1560 = vand.u32 2147483647, %v1309
        %vm1561 = vcmp.eq.f32.partialorder %v1560, 8.507059e+37
        %v1562 = vand.u32 %v1309, 2147483648
        %v1563 = vor.u32 1.1754944e-38, %v1562
        %v1564 = vsel %vm1561, %v1563, %v1559
        %v1565 = vmul.f32 1.0, %v1564
        %v1566 = vrcp.pop %v1310
        %v1567 = vmul.f32 %v1310, %v1566
        %v1568 = vsub.f32 1.0, %v1567
        %v1569 = vmul.f32 %v1566, %v1568
        %v1570 = vadd.f32 %v1566, %v1569
        %vm1571 = vweird.f32 %v1310
        %vm1572 = vweird.f32 %v1566
        %vm1573 = vmor %vm1571, %vm1572
        %v1574 = vsel %vm1573, %v1566, %v1570
        %v1575 = vand.u32 2147483647, %v1310
        %vm1576 = vcmp.eq.f32.partialorder %v1575, 8.507059e+37
        %v1577 = vand.u32 %v1310, 2147483648
        %v1578 = vor.u32 1.1754944e-38, %v1577
        %v1579 = vsel %vm1576, %v1578, %v1574
        %v1580 = vmul.f32 1.0, %v1579
        %v1581 = vrcp.pop %v1311
        %v1582 = vmul.f32 %v1311, %v1581
        %v1583 = vsub.f32 1.0, %v1582
        %v1584 = vmul.f32 %v1581, %v1583
        %v1585 = vadd.f32 %v1581, %v1584
        %vm1586 = vweird.f32 %v1311
        %vm1587 = vweird.f32 %v1581
        %vm1588 = vmor %vm1586, %vm1587
        %v1589 = vsel %vm1588, %v1581, %v1585
        %v1590 = vand.u32 2147483647, %v1311
        %vm1591 = vcmp.eq.f32.partialorder %v1590, 8.507059e+37
        %v1592 = vand.u32 %v1311, 2147483648
        %v1593 = vor.u32 1.1754944e-38, %v1592
        %v1594 = vsel %vm1591, %v1593, %v1589
        %v1595 = vmul.f32 1.0, %v1594
        %v1596 = vrcp.pop %v1312
        %v1597 = vmul.f32 %v1312, %v1596
        %v1598 = vsub.f32 1.0, %v1597
        %v1599 = vmul.f32 %v1596, %v1598
        %v1600 = vadd.f32 %v1596, %v1599
        %vm1601 = vweird.f32 %v1312
        %vm1602 = vweird.f32 %v1596
        %vm1603 = vmor %vm1601, %vm1602
        %v1604 = vsel %vm1603, %v1596, %v1600
        %v1605 = vand.u32 2147483647, %v1312
        %vm1606 = vcmp.eq.f32.partialorder %v1605, 8.507059e+37
        %v1607 = vand.u32 %v1312, 2147483648
        %v1608 = vor.u32 1.1754944e-38, %v1607
        %v1609 = vsel %vm1606, %v1608, %v1604
        %v1610 = vmul.f32 1.0, %v1609
        %v1611 = vrcp.pop %v1313
        %v1612 = vmul.f32 %v1313, %v1611
        %v1613 = vsub.f32 1.0, %v1612
        %v1614 = vmul.f32 %v1611, %v1613
        %v1615 = vadd.f32 %v1611, %v1614
        %vm1616 = vweird.f32 %v1313
        %vm1617 = vweird.f32 %v1611
        %vm1618 = vmor %vm1616, %vm1617
        %v1619 = vsel %vm1618, %v1611, %v1615
        %v1620 = vand.u32 2147483647, %v1313
        %vm1621 = vcmp.eq.f32.partialorder %v1620, 8.507059e+37
        %v1622 = vand.u32 %v1313, 2147483648
        %v1623 = vor.u32 1.1754944e-38, %v1622
        %v1624 = vsel %vm1621, %v1623, %v1619
        %v1625 = vmul.f32 1.0, %v1624
        %v1626 = vrcp.pop %v1314
        %v1627 = vmul.f32 %v1314, %v1626
        %v1628 = vsub.f32 1.0, %v1627
        %v1629 = vmul.f32 %v1626, %v1628
        %v1630 = vadd.f32 %v1626, %v1629
        %vm1631 = vweird.f32 %v1314
        %vm1632 = vweird.f32 %v1626
        %vm1633 = vmor %vm1631, %vm1632
        %v1634 = vsel %vm1633, %v1626, %v1630
        %v1635 = vand.u32 2147483647, %v1314
        %vm1636 = vcmp.eq.f32.partialorder %v1635, 8.507059e+37
        %v1637 = vand.u32 %v1314, 2147483648
        %v1638 = vor.u32 1.1754944e-38, %v1637
        %v1639 = vsel %vm1636, %v1638, %v1634
        %v1640 = vmul.f32 1.0, %v1639
        %v1641 = vrcp.pop %v1315
        %v1642 = vmul.f32 %v1315, %v1641
        %v1643 = vsub.f32 1.0, %v1642
        %v1644 = vmul.f32 %v1641, %v1643
        %v1645 = vadd.f32 %v1641, %v1644
        %vm1646 = vweird.f32 %v1315
        %vm1647 = vweird.f32 %v1641
        %vm1648 = vmor %vm1646, %vm1647
        %v1649 = vsel %vm1648, %v1641, %v1645
        %v1650 = vand.u32 2147483647, %v1315
        %vm1651 = vcmp.eq.f32.partialorder %v1650, 8.507059e+37
        %v1652 = vand.u32 %v1315, 2147483648
        %v1653 = vor.u32 1.1754944e-38, %v1652
        %v1654 = vsel %vm1651, %v1653, %v1649
        %v1655 = vmul.f32 1.0, %v1654
        %v1656 = vrcp.pop %v1316
        %v1657 = vmul.f32 %v1316, %v1656
        %v1658 = vsub.f32 1.0, %v1657
        %v1659 = vmul.f32 %v1656, %v1658
        %v1660 = vadd.f32 %v1656, %v1659
        %vm1661 = vweird.f32 %v1316
        %vm1662 = vweird.f32 %v1656
        %vm1663 = vmor %vm1661, %vm1662
        %v1664 = vsel %vm1663, %v1656, %v1660
        %v1665 = vand.u32 2147483647, %v1316
        %vm1666 = vcmp.eq.f32.partialorder %v1665, 8.507059e+37
        %v1667 = vand.u32 %v1316, 2147483648
        %v1668 = vor.u32 1.1754944e-38, %v1667
        %v1669 = vsel %vm1666, %v1668, %v1664
        %v1670 = vmul.f32 1.0, %v1669
        %v1671 = vrcp.pop %v1317
        %v1672 = vmul.f32 %v1317, %v1671
        %v1673 = vsub.f32 1.0, %v1672
        %v1674 = vmul.f32 %v1671, %v1673
        %v1675 = vadd.f32 %v1671, %v1674
        %vm1676 = vweird.f32 %v1317
        %vm1677 = vweird.f32 %v1671
        %vm1678 = vmor %vm1676, %vm1677
        %v1679 = vsel %vm1678, %v1671, %v1675
        %v1680 = vand.u32 2147483647, %v1317
        %vm1681 = vcmp.eq.f32.partialorder %v1680, 8.507059e+37
        %v1682 = vand.u32 %v1317, 2147483648
        %v1683 = vor.u32 1.1754944e-38, %v1682
        %v1684 = vsel %vm1681, %v1683, %v1679
        %v1685 = vmul.f32 1.0, %v1684
        %v1686 = vrcp.pop %v1318
        %v1687 = vmul.f32 %v1318, %v1686
        %v1688 = vsub.f32 1.0, %v1687
        %v1689 = vmul.f32 %v1686, %v1688
        %v1690 = vadd.f32 %v1686, %v1689
        %vm1691 = vweird.f32 %v1318
        %vm1692 = vweird.f32 %v1686
        %vm1693 = vmor %vm1691, %vm1692
        %v1694 = vsel %vm1693, %v1686, %v1690
        %v1695 = vand.u32 2147483647, %v1318
        %vm1696 = vcmp.eq.f32.partialorder %v1695, 8.507059e+37
        %v1697 = vand.u32 %v1318, 2147483648
        %v1698 = vor.u32 1.1754944e-38, %v1697
        %v1699 = vsel %vm1696, %v1698, %v1694
        %v1700 = vmul.f32 1.0, %v1699
        %v1701 = vrcp.pop %v1319
        %v1702 = vmul.f32 %v1319, %v1701
        %v1703 = vsub.f32 1.0, %v1702
        %v1704 = vmul.f32 %v1701, %v1703
        %v1705 = vadd.f32 %v1701, %v1704
        %vm1706 = vweird.f32 %v1319
        %vm1707 = vweird.f32 %v1701
        %vm1708 = vmor %vm1706, %vm1707
        %v1709 = vsel %vm1708, %v1701, %v1705
        %v1710 = vand.u32 2147483647, %v1319
        %vm1711 = vcmp.eq.f32.partialorder %v1710, 8.507059e+37
        %v1712 = vand.u32 %v1319, 2147483648
        %v1713 = vor.u32 1.1754944e-38, %v1712
        %v1714 = vsel %vm1711, %v1713, %v1709
        %v1715 = vmul.f32 1.0, %v1714
        %v1716 = vrcp.pop %v1320
        %v1717 = vmul.f32 %v1320, %v1716
        %v1718 = vsub.f32 1.0, %v1717
        %v1719 = vmul.f32 %v1716, %v1718
        %v1720 = vadd.f32 %v1716, %v1719
        %vm1721 = vweird.f32 %v1320
        %vm1722 = vweird.f32 %v1716
        %vm1723 = vmor %vm1721, %vm1722
        %v1724 = vsel %vm1723, %v1716, %v1720
        %v1725 = vand.u32 2147483647, %v1320
        %vm1726 = vcmp.eq.f32.partialorder %v1725, 8.507059e+37
        %v1727 = vand.u32 %v1320, 2147483648
        %v1728 = vor.u32 1.1754944e-38, %v1727
        %v1729 = vsel %vm1726, %v1728, %v1724
        %v1730 = vmul.f32 1.0, %v1729
        %v1731 = vrcp.pop %v1321
        %v1732 = vmul.f32 %v1321, %v1731
        %v1733 = vsub.f32 1.0, %v1732
        %v1734 = vmul.f32 %v1731, %v1733
        %v1735 = vadd.f32 %v1731, %v1734
        %vm1736 = vweird.f32 %v1321
        %vm1737 = vweird.f32 %v1731
        %vm1738 = vmor %vm1736, %vm1737
        %v1739 = vsel %vm1738, %v1731, %v1735
        %v1740 = vand.u32 2147483647, %v1321
        %vm1741 = vcmp.eq.f32.partialorder %v1740, 8.507059e+37
        %v1742 = vand.u32 %v1321, 2147483648
        %v1743 = vor.u32 1.1754944e-38, %v1742
        %v1744 = vsel %vm1741, %v1743, %v1739
        %v1745 = vmul.f32 1.0, %v1744
        %v1746 = vrcp.pop %v1322
        %v1747 = vmul.f32 %v1322, %v1746
        %v1748 = vsub.f32 1.0, %v1747
        %v1749 = vmul.f32 %v1746, %v1748
        %v1750 = vadd.f32 %v1746, %v1749
        %vm1751 = vweird.f32 %v1322
        %vm1752 = vweird.f32 %v1746
        %vm1753 = vmor %vm1751, %vm1752
        %v1754 = vsel %vm1753, %v1746, %v1750
        %v1755 = vand.u32 2147483647, %v1322
        %vm1756 = vcmp.eq.f32.partialorder %v1755, 8.507059e+37
        %v1757 = vand.u32 %v1322, 2147483648
        %v1758 = vor.u32 1.1754944e-38, %v1757
        %v1759 = vsel %vm1756, %v1758, %v1754
        %v1760 = vmul.f32 1.0, %v1759
        %v1761 = vrcp.pop %v1323
        %v1762 = vmul.f32 %v1323, %v1761
        %v1763 = vsub.f32 1.0, %v1762
        %v1764 = vmul.f32 %v1761, %v1763
        %v1765 = vadd.f32 %v1761, %v1764
        %vm1766 = vweird.f32 %v1323
        %vm1767 = vweird.f32 %v1761
        %vm1768 = vmor %vm1766, %vm1767
        %v1769 = vsel %vm1768, %v1761, %v1765
        %v1770 = vand.u32 2147483647, %v1323
        %vm1771 = vcmp.eq.f32.partialorder %v1770, 8.507059e+37
        %v1772 = vand.u32 %v1323, 2147483648
        %v1773 = vor.u32 1.1754944e-38, %v1772
        %v1774 = vsel %vm1771, %v1773, %v1769
        %v1775 = vmul.f32 1.0, %v1774
        %v1776 = vrcp.pop %v1324
        %v1777 = vmul.f32 %v1324, %v1776
        %v1778 = vsub.f32 1.0, %v1777
        %v1779 = vmul.f32 %v1776, %v1778
        %v1780 = vadd.f32 %v1776, %v1779
        %vm1781 = vweird.f32 %v1324
        %vm1782 = vweird.f32 %v1776
        %vm1783 = vmor %vm1781, %vm1782
        %v1784 = vsel %vm1783, %v1776, %v1780
        %v1785 = vand.u32 2147483647, %v1324
        %vm1786 = vcmp.eq.f32.partialorder %v1785, 8.507059e+37
        %v1787 = vand.u32 %v1324, 2147483648
        %v1788 = vor.u32 1.1754944e-38, %v1787
        %v1789 = vsel %vm1786, %v1788, %v1784
        %v1790 = vmul.f32 1.0, %v1789
        %v1791 = vrcp.pop %v1325
        %v1792 = vmul.f32 %v1325, %v1791
        %v1793 = vsub.f32 1.0, %v1792
        %v1794 = vmul.f32 %v1791, %v1793
        %v1795 = vadd.f32 %v1791, %v1794
        %vm1796 = vweird.f32 %v1325
        %vm1797 = vweird.f32 %v1791
        %vm1798 = vmor %vm1796, %vm1797
        %v1799 = vsel %vm1798, %v1791, %v1795
        %v1800 = vand.u32 2147483647, %v1325
        %vm1801 = vcmp.eq.f32.partialorder %v1800, 8.507059e+37
        %v1802 = vand.u32 %v1325, 2147483648
        %v1803 = vor.u32 1.1754944e-38, %v1802
        %v1804 = vsel %vm1801, %v1803, %v1799
        %v1805 = vmul.f32 1.0, %v1804
        %v1806 = vmul.f32 %v865, %v1340
        %v1807 = vmul.f32 %v963, %v1355
        %v1808 = vmul.f32 %v867, %v1370
        %v1809 = vmul.f32 %v965, %v1385
        %v1810 = vmul.f32 %v870, %v1400
        %v1811 = vmul.f32 %v968, %v1415
        %v1812 = vmul.f32 %v872, %v1430
        %v1813 = vmul.f32 %v970, %v1445
        %v1814 = vmul.f32 %v875, %v1460
        %v1815 = vmul.f32 %v973, %v1475
        %v1816 = vmul.f32 %v877, %v1490
        %v1817 = vmul.f32 %v975, %v1505
        %v1818 = vmul.f32 %v880, %v1520
        %v1819 = vmul.f32 %v978, %v1535
        %v1820 = vmul.f32 %v882, %v1550
        %v1821 = vmul.f32 %v980, %v1565
        %v1822 = vmul.f32 %v885, %v1580
        %v1823 = vmul.f32 %v983, %v1595
        %v1824 = vmul.f32 %v887, %v1610
        %v1825 = vmul.f32 %v985, %v1625
        %v1826 = vmul.f32 %v890, %v1640
        %v1827 = vmul.f32 %v988, %v1655
        %v1828 = vmul.f32 %v892, %v1670
        %v1829 = vmul.f32 %v990, %v1685
        %v1830 = vmul.f32 %v895, %v1700
        %v1831 = vmul.f32 %v993, %v1715
        %v1832 = vmul.f32 %v897, %v1730
        %v1833 = vmul.f32 %v995, %v1745
        %v1834 = vmul.f32 %v900, %v1760
        %v1835 = vmul.f32 %v998, %v1775
        %v1836 = vmul.f32 %v902, %v1790
        %v1837 = vmul.f32 %v1000, %v1805
        %v1838 = vmul.f32 %v1806, %v1061
        %v1839 = vmul.f32 %v1807, %v1159
        %v1840 = vmul.f32 %v1808, %v1063
        %v1841 = vmul.f32 %v1809, %v1161
        %v1842 = vmul.f32 %v1810, %v1066
        %v1843 = vmul.f32 %v1811, %v1164
        %v1844 = vmul.f32 %v1812, %v1068
        %v1845 = vmul.f32 %v1813, %v1166
        %v1846 = vmul.f32 %v1814, %v1071
        %v1847 = vmul.f32 %v1815, %v1169
        %v1848 = vmul.f32 %v1816, %v1073
        %v1849 = vmul.f32 %v1817, %v1171
        %v1850 = vmul.f32 %v1818, %v1076
        %v1851 = vmul.f32 %v1819, %v1174
        %v1852 = vmul.f32 %v1820, %v1078
        %v1853 = vmul.f32 %v1821, %v1176
        %v1854 = vmul.f32 %v1822, %v1081
        %v1855 = vmul.f32 %v1823, %v1179
        %v1856 = vmul.f32 %v1824, %v1083
        %v1857 = vmul.f32 %v1825, %v1181
        %v1858 = vmul.f32 %v1826, %v1086
        %v1859 = vmul.f32 %v1827, %v1184
        %v1860 = vmul.f32 %v1828, %v1088
        %v1861 = vmul.f32 %v1829, %v1186
        %v1862 = vmul.f32 %v1830, %v1091
        %v1863 = vmul.f32 %v1831, %v1189
        %v1864 = vmul.f32 %v1832, %v1093
        %v1865 = vmul.f32 %v1833, %v1191
        %v1866 = vmul.f32 %v1834, %v1096
        %v1867 = vmul.f32 %v1835, %v1194
        %v1868 = vmul.f32 %v1836, %v1098
        %v1869 = vmul.f32 %v1837, %v1196
        %v1870 = vpack.c.bf16 %v1840, %v1838
        %v1871 = vpack.c.bf16 %v1841, %v1839
        %v1872 = vpack.c.bf16 %v1844, %v1842
        %v1873 = vpack.c.bf16 %v1845, %v1843
        %v1874 = vpack.c.bf16 %v1848, %v1846
        %v1875 = vpack.c.bf16 %v1849, %v1847
        %v1876 = vpack.c.bf16 %v1852, %v1850
        %v1877 = vpack.c.bf16 %v1853, %v1851
        %v1878 = vpack.c.bf16 %v1856, %v1854
        %v1879 = vpack.c.bf16 %v1857, %v1855
        %v1880 = vpack.c.bf16 %v1860, %v1858
        %v1881 = vpack.c.bf16 %v1861, %v1859
        %v1882 = vpack.c.bf16 %v1864, %v1862
        %v1883 = vpack.c.bf16 %v1865, %v1863
        %v1884 = vpack.c.bf16 %v1868, %v1866
        %v1885 = vpack.c.bf16 %v1869, %v1867
        %v1886 = vld [vmem:[#allocation2] sm:$0xff]
        %v1887 = vld [vmem:[#allocation2 + $0x8] sm:$0xff]
        %v1888 = vld [vmem:[#allocation2 + $0x10] sm:$0xff]
        %v1889 = vld [vmem:[#allocation2 + $0x18] sm:$0xff]
        %v1890 = vld [vmem:[#allocation2 + $0x20] sm:$0xff]
        %v1891 = vld [vmem:[#allocation2 + $0x28] sm:$0xff]
        %v1892 = vld [vmem:[#allocation2 + $0x30] sm:$0xff]
        %v1893 = vld [vmem:[#allocation2 + $0x38] sm:$0xff]
        %v1894 = vld [vmem:[#allocation2 + $0x40] sm:$0xff]
        %v1895 = vld [vmem:[#allocation2 + $0x48] sm:$0xff]
        %v1896 = vld [vmem:[#allocation2 + $0x50] sm:$0xff]
        %v1897 = vld [vmem:[#allocation2 + $0x58] sm:$0xff]
        %v1898 = vld [vmem:[#allocation2 + $0x60] sm:$0xff]
        %v1899 = vld [vmem:[#allocation2 + $0x68] sm:$0xff]
        %v1900 = vld [vmem:[#allocation2 + $0x70] sm:$0xff]
        %v1901 = vld [vmem:[#allocation2 + $0x78] sm:$0xff]
        %v1902 = vld [vmem:[#allocation2 + $0x80] sm:$0xff]
        %v1903 = vld [vmem:[#allocation2 + $0x88] sm:$0xff]
        %v1904 = vld [vmem:[#allocation2 + $0x90] sm:$0xff]
        %v1905 = vld [vmem:[#allocation2 + $0x98] sm:$0xff]
        %v1906 = vld [vmem:[#allocation2 + $0xa0] sm:$0xff]
        %v1907 = vld [vmem:[#allocation2 + $0xa8] sm:$0xff]
        %v1908 = vld [vmem:[#allocation2 + $0xb0] sm:$0xff]
        %v1909 = vld [vmem:[#allocation2 + $0xb8] sm:$0xff]
        %v1910 = vld [vmem:[#allocation2 + $0xc0] sm:$0xff]
        %v1911 = vld [vmem:[#allocation2 + $0xc8] sm:$0xff]
        %v1912 = vld [vmem:[#allocation2 + $0xd0] sm:$0xff]
        %v1913 = vld [vmem:[#allocation2 + $0xd8] sm:$0xff]
        %v1914 = vld [vmem:[#allocation2 + $0xe0] sm:$0xff]
        %v1915 = vld [vmem:[#allocation2 + $0xe8] sm:$0xff]
        %v1916 = vld [vmem:[#allocation2 + $0xf0] sm:$0xff]
        %v1917 = vld [vmem:[#allocation2 + $0xf8] sm:$0xff]
        %v1918 = vld [vmem:[%s252] sm:$0xff]
        %v1919 = vld [vmem:[%s252 + $0x8] sm:$0xff]
        %v1920 = vld [vmem:[%s252 + $0x10] sm:$0xff]
        %v1921 = vld [vmem:[%s252 + $0x18] sm:$0xff]
        %v1922 = vld [vmem:[%s252 + $0x20] sm:$0xff]
        %v1923 = vld [vmem:[%s252 + $0x28] sm:$0xff]
        %v1924 = vld [vmem:[%s252 + $0x30] sm:$0xff]
        %v1925 = vld [vmem:[%s252 + $0x38] sm:$0xff]
        %v1926 = vld [vmem:[%s252 + $0x40] sm:$0xff]
        %v1927 = vld [vmem:[%s252 + $0x48] sm:$0xff]
        %v1928 = vld [vmem:[%s252 + $0x50] sm:$0xff]
        %v1929 = vld [vmem:[%s252 + $0x58] sm:$0xff]
        %v1930 = vld [vmem:[%s252 + $0x60] sm:$0xff]
        %v1931 = vld [vmem:[%s252 + $0x68] sm:$0xff]
        %v1932 = vld [vmem:[%s252 + $0x70] sm:$0xff]
        %v1933 = vld [vmem:[%s252 + $0x78] sm:$0xff]
        %v1934 = vld [vmem:[%s252 + $0x80] sm:$0xff]
        %v1935 = vld [vmem:[%s252 + $0x88] sm:$0xff]
        %v1936 = vld [vmem:[%s252 + $0x90] sm:$0xff]
        %v1937 = vld [vmem:[%s252 + $0x98] sm:$0xff]
        %v1938 = vld [vmem:[%s252 + $0xa0] sm:$0xff]
        %v1939 = vld [vmem:[%s252 + $0xa8] sm:$0xff]
        %v1940 = vld [vmem:[%s252 + $0xb0] sm:$0xff]
        %v1941 = vld [vmem:[%s252 + $0xb8] sm:$0xff]
        %v1942 = vld [vmem:[%s252 + $0xc0] sm:$0xff]
        %v1943 = vld [vmem:[%s252 + $0xc8] sm:$0xff]
        %v1944 = vld [vmem:[%s252 + $0xd0] sm:$0xff]
        %v1945 = vld [vmem:[%s252 + $0xd8] sm:$0xff]
        %v1946 = vld [vmem:[%s252 + $0xe0] sm:$0xff]
        %v1947 = vld [vmem:[%s252 + $0xe8] sm:$0xff]
        %v1948 = vld [vmem:[%s252 + $0xf0] sm:$0xff]
        %v1949 = vld [vmem:[%s252 + $0xf8] sm:$0xff]
        %v1982 = vunpack.c.l.b16 %v1918
        %v1983 = vunpack.c.h.b16 %v1918
        %v1984 = vunpack.c.l.b16 %v1919
        %v1985 = vunpack.c.h.b16 %v1919
        %v1986 = vunpack.c.l.b16 %v1920
        %v1987 = vunpack.c.h.b16 %v1920
        %v1988 = vunpack.c.l.b16 %v1921
        %v1989 = vunpack.c.h.b16 %v1921
        %v1990 = vunpack.c.l.b16 %v1922
        %v1991 = vunpack.c.h.b16 %v1922
        %v1992 = vunpack.c.l.b16 %v1923
        %v1993 = vunpack.c.h.b16 %v1923
        %v1994 = vunpack.c.l.b16 %v1924
        %v1995 = vunpack.c.h.b16 %v1924
        %v1996 = vunpack.c.l.b16 %v1925
        %v1997 = vunpack.c.h.b16 %v1925
        %v1998 = vunpack.c.l.b16 %v1926
        %v1999 = vunpack.c.h.b16 %v1926
        %v2000 = vunpack.c.l.b16 %v1927
        %v2001 = vunpack.c.h.b16 %v1927
        %v2002 = vunpack.c.l.b16 %v1928
        %v2003 = vunpack.c.h.b16 %v1928
        %v2004 = vunpack.c.l.b16 %v1929
        %v2005 = vunpack.c.h.b16 %v1929
        %v2006 = vunpack.c.l.b16 %v1930
        %v2007 = vunpack.c.h.b16 %v1930
        %v2008 = vunpack.c.l.b16 %v1931
        %v2009 = vunpack.c.h.b16 %v1931
        %v2010 = vunpack.c.l.b16 %v1932
        %v2011 = vunpack.c.h.b16 %v1932
        %v2012 = vunpack.c.l.b16 %v1933
        %v2013 = vunpack.c.h.b16 %v1933
        %v2014 = vunpack.c.l.b16 %v1934
        %v2015 = vunpack.c.h.b16 %v1934
        %v2016 = vunpack.c.l.b16 %v1935
        %v2017 = vunpack.c.h.b16 %v1935
        %v2018 = vunpack.c.l.b16 %v1936
        %v2019 = vunpack.c.h.b16 %v1936
        %v2020 = vunpack.c.l.b16 %v1937
        %v2021 = vunpack.c.h.b16 %v1937
        %v2022 = vunpack.c.l.b16 %v1938
        %v2023 = vunpack.c.h.b16 %v1938
        %v2024 = vunpack.c.l.b16 %v1939
        %v2025 = vunpack.c.h.b16 %v1939
        %v2026 = vunpack.c.l.b16 %v1940
        %v2027 = vunpack.c.h.b16 %v1940
        %v2028 = vunpack.c.l.b16 %v1941
        %v2029 = vunpack.c.h.b16 %v1941
        %v2030 = vunpack.c.l.b16 %v1942
        %v2031 = vunpack.c.h.b16 %v1942
        %v2032 = vunpack.c.l.b16 %v1943
        %v2033 = vunpack.c.h.b16 %v1943
        %v2034 = vunpack.c.l.b16 %v1944
        %v2035 = vunpack.c.h.b16 %v1944
        %v2036 = vunpack.c.l.b16 %v1945
        %v2037 = vunpack.c.h.b16 %v1945
        %v2038 = vunpack.c.l.b16 %v1946
        %v2039 = vunpack.c.h.b16 %v1946
        %v2040 = vunpack.c.l.b16 %v1947
        %v2041 = vunpack.c.h.b16 %v1947
        %v2042 = vunpack.c.l.b16 %v1948
        %v2043 = vunpack.c.h.b16 %v1948
        %v2044 = vunpack.c.l.b16 %v1949
        %v2045 = vunpack.c.h.b16 %v1949
        %v2046 = vpack.c.b16 %v1984, %v1982
        %v2047 = vpack.c.b16 %v1985, %v1983
        %v2048 = vpack.c.b16 %v1988, %v1986
        %v2049 = vpack.c.b16 %v1989, %v1987
        %v2050 = vpack.c.b16 %v1992, %v1990
        %v2051 = vpack.c.b16 %v1993, %v1991
        %v2052 = vpack.c.b16 %v1996, %v1994
        %v2053 = vpack.c.b16 %v1997, %v1995
        %v2054 = vpack.c.b16 %v2000, %v1998
        %v2055 = vpack.c.b16 %v2001, %v1999
        %v2056 = vpack.c.b16 %v2004, %v2002
        %v2057 = vpack.c.b16 %v2005, %v2003
        %v2058 = vpack.c.b16 %v2008, %v2006
        %v2059 = vpack.c.b16 %v2009, %v2007
        %v2060 = vpack.c.b16 %v2012, %v2010
        %v2061 = vpack.c.b16 %v2013, %v2011
        %v2062 = vpack.c.b16 %v2016, %v2014
        %v2063 = vpack.c.b16 %v2017, %v2015
        %v2064 = vpack.c.b16 %v2020, %v2018
        %v2065 = vpack.c.b16 %v2021, %v2019
        %v2066 = vpack.c.b16 %v2024, %v2022
        %v2067 = vpack.c.b16 %v2025, %v2023
        %v2068 = vpack.c.b16 %v2028, %v2026
        %v2069 = vpack.c.b16 %v2029, %v2027
        %v2070 = vpack.c.b16 %v2032, %v2030
        %v2071 = vpack.c.b16 %v2033, %v2031
        %v2072 = vpack.c.b16 %v2036, %v2034
        %v2073 = vpack.c.b16 %v2037, %v2035
        %v2074 = vpack.c.b16 %v2040, %v2038
        %v2075 = vpack.c.b16 %v2041, %v2039
        %v2076 = vpack.c.b16 %v2044, %v2042
        %v2077 = vpack.c.b16 %v2045, %v2043
        %2110 = vmatpush.bf16.msra.mxu0 %v2060
        %2111 = vmatpush.bf16.msra.mxu0 %v2058
        %2112 = vmatpush.bf16.msra.mxu0 %v2056
        %2113 = vmatpush.bf16.msra.mxu0 %v2054
        %2114 = vmatpush.bf16.msra.mxu0 %v2052
        %2115 = vmatpush.bf16.msra.mxu0 %v2050
        %2116 = vmatpush.bf16.msra.mxu0 %v2048
        %2117 = vmatpush.bf16.msra.mxu0 %v2046
        %2118 = vmatmul.bf16.gmra.mxu0 %v1870
        %v2119 = vpop.f32.mrf.mxu0
        %v2120 = vadd.f32 0.0, %v2119
        %v2121 = vpop.f32.mrf.mxu0
        %v2122 = vadd.f32 0.0, %v2121
        %2123 = vmatmul.bf16.gmra.mxu0 %v1872
        %v2124 = vpop.f32.mrf.mxu0
        %v2125 = vadd.f32 0.0, %v2124
        %v2126 = vpop.f32.mrf.mxu0
        %v2127 = vadd.f32 0.0, %v2126
        %2128 = vmatmul.bf16.gmra.mxu0 %v1874
        %v2129 = vpop.f32.mrf.mxu0
        %v2130 = vadd.f32 0.0, %v2129
        %v2131 = vpop.f32.mrf.mxu0
        %v2132 = vadd.f32 0.0, %v2131
        %2133 = vmatmul.bf16.gmra.mxu0 %v1876
        %v2134 = vpop.f32.mrf.mxu0
        %v2135 = vadd.f32 0.0, %v2134
        %v2136 = vpop.f32.mrf.mxu0
        %v2137 = vadd.f32 0.0, %v2136
        %2138 = vmatmul.bf16.gmra.mxu0 %v1878
        %v2139 = vpop.f32.mrf.mxu0
        %v2140 = vadd.f32 0.0, %v2139
        %v2141 = vpop.f32.mrf.mxu0
        %v2142 = vadd.f32 0.0, %v2141
        %2143 = vmatmul.bf16.gmra.mxu0 %v1880
        %v2144 = vpop.f32.mrf.mxu0
        %v2145 = vadd.f32 0.0, %v2144
        %v2146 = vpop.f32.mrf.mxu0
        %v2147 = vadd.f32 0.0, %v2146
        %2148 = vmatmul.bf16.gmra.mxu0 %v1882
        %v2149 = vpop.f32.mrf.mxu0
        %v2150 = vadd.f32 0.0, %v2149
        %v2151 = vpop.f32.mrf.mxu0
        %v2152 = vadd.f32 0.0, %v2151
        %2153 = vmatmul.bf16.gmra.mxu0 %v1884
        %v2154 = vpop.f32.mrf.mxu0
        %v2155 = vadd.f32 0.0, %v2154
        %v2156 = vpop.f32.mrf.mxu0
        %v2157 = vadd.f32 0.0, %v2156
        %2158 = vdwg.mxu0
        %2159 = vmatpush.bf16.msra.mxu0 %v2076
        %2160 = vmatpush.bf16.msra.mxu0 %v2074
        %2161 = vmatpush.bf16.msra.mxu0 %v2072
        %2162 = vmatpush.bf16.msra.mxu0 %v2070
        %2163 = vmatpush.bf16.msra.mxu0 %v2068
        %2164 = vmatpush.bf16.msra.mxu0 %v2066
        %2165 = vmatpush.bf16.msra.mxu0 %v2064
        %2166 = vmatpush.bf16.msra.mxu0 %v2062
        %2167 = vmatmul.bf16.gmra.mxu0 %v1871
        %v2168 = vpop.f32.mrf.mxu0
        %v2169 = vadd.f32 %v2120, %v2168
        %v2170 = vpop.f32.mrf.mxu0
        %v2171 = vadd.f32 %v2122, %v2170
        %2172 = vmatmul.bf16.gmra.mxu0 %v1873
        %v2173 = vpop.f32.mrf.mxu0
        %v2174 = vadd.f32 %v2125, %v2173
        %v2175 = vpop.f32.mrf.mxu0
        %v2176 = vadd.f32 %v2127, %v2175
        %2177 = vmatmul.bf16.gmra.mxu0 %v1875
        %v2178 = vpop.f32.mrf.mxu0
        %v2179 = vadd.f32 %v2130, %v2178
        %v2180 = vpop.f32.mrf.mxu0
        %v2181 = vadd.f32 %v2132, %v2180
        %2182 = vmatmul.bf16.gmra.mxu0 %v1877
        %v2183 = vpop.f32.mrf.mxu0
        %v2184 = vadd.f32 %v2135, %v2183
        %v2185 = vpop.f32.mrf.mxu0
        %v2186 = vadd.f32 %v2137, %v2185
        %2187 = vmatmul.bf16.gmra.mxu0 %v1879
        %v2188 = vpop.f32.mrf.mxu0
        %v2189 = vadd.f32 %v2140, %v2188
        %v2190 = vpop.f32.mrf.mxu0
        %v2191 = vadd.f32 %v2142, %v2190
        %2192 = vmatmul.bf16.gmra.mxu0 %v1881
        %v2193 = vpop.f32.mrf.mxu0
        %v2194 = vadd.f32 %v2145, %v2193
        %v2195 = vpop.f32.mrf.mxu0
        %v2196 = vadd.f32 %v2147, %v2195
        %2197 = vmatmul.bf16.gmra.mxu0 %v1883
        %v2198 = vpop.f32.mrf.mxu0
        %v2199 = vadd.f32 %v2150, %v2198
        %v2200 = vpop.f32.mrf.mxu0
        %v2201 = vadd.f32 %v2152, %v2200
        %2202 = vmatmul.bf16.gmra.mxu0 %v1885
        %v2203 = vpop.f32.mrf.mxu0
        %v2204 = vadd.f32 %v2155, %v2203
        %v2205 = vpop.f32.mrf.mxu0
        %v2206 = vadd.f32 %v2157, %v2205
        %2207 = vdwg.mxu0
        %2208 = vmatpush.bf16.msra.mxu0 %v2061
        %2209 = vmatpush.bf16.msra.mxu0 %v2059
        %2210 = vmatpush.bf16.msra.mxu0 %v2057
        %2211 = vmatpush.bf16.msra.mxu0 %v2055
        %2212 = vmatpush.bf16.msra.mxu0 %v2053
        %2213 = vmatpush.bf16.msra.mxu0 %v2051
        %2214 = vmatpush.bf16.msra.mxu0 %v2049
        %2215 = vmatpush.bf16.msra.mxu0 %v2047
        %2216 = vmatmul.bf16.gmra.mxu0 %v1870
        %v2217 = vpop.f32.mrf.mxu0
        %v2218 = vadd.f32 0.0, %v2217
        %v2219 = vpop.f32.mrf.mxu0
        %v2220 = vadd.f32 0.0, %v2219
        %2221 = vmatmul.bf16.gmra.mxu0 %v1872
        %v2222 = vpop.f32.mrf.mxu0
        %v2223 = vadd.f32 0.0, %v2222
        %v2224 = vpop.f32.mrf.mxu0
        %v2225 = vadd.f32 0.0, %v2224
        %2226 = vmatmul.bf16.gmra.mxu0 %v1874
        %v2227 = vpop.f32.mrf.mxu0
        %v2228 = vadd.f32 0.0, %v2227
        %v2229 = vpop.f32.mrf.mxu0
        %v2230 = vadd.f32 0.0, %v2229
        %2231 = vmatmul.bf16.gmra.mxu0 %v1876
        %v2232 = vpop.f32.mrf.mxu0
        %v2233 = vadd.f32 0.0, %v2232
        %v2234 = vpop.f32.mrf.mxu0
        %v2235 = vadd.f32 0.0, %v2234
        %2236 = vmatmul.bf16.gmra.mxu0 %v1878
        %v2237 = vpop.f32.mrf.mxu0
        %v2238 = vadd.f32 0.0, %v2237
        %v2239 = vpop.f32.mrf.mxu0
        %v2240 = vadd.f32 0.0, %v2239
        %2241 = vmatmul.bf16.gmra.mxu0 %v1880
        %v2242 = vpop.f32.mrf.mxu0
        %v2243 = vadd.f32 0.0, %v2242
        %v2244 = vpop.f32.mrf.mxu0
        %v2245 = vadd.f32 0.0, %v2244
        %2246 = vmatmul.bf16.gmra.mxu0 %v1882
        %v2247 = vpop.f32.mrf.mxu0
        %v2248 = vadd.f32 0.0, %v2247
        %v2249 = vpop.f32.mrf.mxu0
        %v2250 = vadd.f32 0.0, %v2249
        %2251 = vmatmul.bf16.gmra.mxu0 %v1884
        %v2252 = vpop.f32.mrf.mxu0
        %v2253 = vadd.f32 0.0, %v2252
        %v2254 = vpop.f32.mrf.mxu0
        %v2255 = vadd.f32 0.0, %v2254
        %2256 = vdwg.mxu0
        %2257 = vmatpush.bf16.msra.mxu0 %v2077
        %2258 = vmatpush.bf16.msra.mxu0 %v2075
        %2259 = vmatpush.bf16.msra.mxu0 %v2073
        %2260 = vmatpush.bf16.msra.mxu0 %v2071
        %2261 = vmatpush.bf16.msra.mxu0 %v2069
        %2262 = vmatpush.bf16.msra.mxu0 %v2067
        %2263 = vmatpush.bf16.msra.mxu0 %v2065
        %2264 = vmatpush.bf16.msra.mxu0 %v2063
        %2265 = vmatmul.bf16.gmra.mxu0 %v1871
        %v2266 = vpop.f32.mrf.mxu0
        %v2267 = vadd.f32 %v2218, %v2266
        %v2268 = vpop.f32.mrf.mxu0
        %v2269 = vadd.f32 %v2220, %v2268
        %2270 = vmatmul.bf16.gmra.mxu0 %v1873
        %v2271 = vpop.f32.mrf.mxu0
        %v2272 = vadd.f32 %v2223, %v2271
        %v2273 = vpop.f32.mrf.mxu0
        %v2274 = vadd.f32 %v2225, %v2273
        %2275 = vmatmul.bf16.gmra.mxu0 %v1875
        %v2276 = vpop.f32.mrf.mxu0
        %v2277 = vadd.f32 %v2228, %v2276
        %v2278 = vpop.f32.mrf.mxu0
        %v2279 = vadd.f32 %v2230, %v2278
        %2280 = vmatmul.bf16.gmra.mxu0 %v1877
        %v2281 = vpop.f32.mrf.mxu0
        %v2282 = vadd.f32 %v2233, %v2281
        %v2283 = vpop.f32.mrf.mxu0
        %v2284 = vadd.f32 %v2235, %v2283
        %2285 = vmatmul.bf16.gmra.mxu0 %v1879
        %v2286 = vpop.f32.mrf.mxu0
        %v2287 = vadd.f32 %v2238, %v2286
        %v2288 = vpop.f32.mrf.mxu0
        %v2289 = vadd.f32 %v2240, %v2288
        %2290 = vmatmul.bf16.gmra.mxu0 %v1881
        %v2291 = vpop.f32.mrf.mxu0
        %v2292 = vadd.f32 %v2243, %v2291
        %v2293 = vpop.f32.mrf.mxu0
        %v2294 = vadd.f32 %v2245, %v2293
        %2295 = vmatmul.bf16.gmra.mxu0 %v1883
        %v2296 = vpop.f32.mrf.mxu0
        %v2297 = vadd.f32 %v2248, %v2296
        %v2298 = vpop.f32.mrf.mxu0
        %v2299 = vadd.f32 %v2250, %v2298
        %2300 = vmatmul.bf16.gmra.mxu0 %v1885
        %v2301 = vpop.f32.mrf.mxu0
        %v2302 = vadd.f32 %v2253, %v2301
        %v2303 = vpop.f32.mrf.mxu0
        %v2304 = vadd.f32 %v2255, %v2303
        %2305 = vdwg.mxu0
        %v2306 = vadd.f32 %v1886, %v2169
        %v2307 = vadd.f32 %v1887, %v2267
        %v2308 = vadd.f32 %v1888, %v2171
        %v2309 = vadd.f32 %v1889, %v2269
        %v2310 = vadd.f32 %v1890, %v2174
        %v2311 = vadd.f32 %v1891, %v2272
        %v2312 = vadd.f32 %v1892, %v2176
        %v2313 = vadd.f32 %v1893, %v2274
        %v2314 = vadd.f32 %v1894, %v2179
        %v2315 = vadd.f32 %v1895, %v2277
        %v2316 = vadd.f32 %v1896, %v2181
        %v2317 = vadd.f32 %v1897, %v2279
        %v2318 = vadd.f32 %v1898, %v2184
        %v2319 = vadd.f32 %v1899, %v2282
        %v2320 = vadd.f32 %v1900, %v2186
        %v2321 = vadd.f32 %v1901, %v2284
        %v2322 = vadd.f32 %v1902, %v2189
        %v2323 = vadd.f32 %v1903, %v2287
        %v2324 = vadd.f32 %v1904, %v2191
        %v2325 = vadd.f32 %v1905, %v2289
        %v2326 = vadd.f32 %v1906, %v2194
        %v2327 = vadd.f32 %v1907, %v2292
        %v2328 = vadd.f32 %v1908, %v2196
        %v2329 = vadd.f32 %v1909, %v2294
        %v2330 = vadd.f32 %v1910, %v2199
        %v2331 = vadd.f32 %v1911, %v2297
        %v2332 = vadd.f32 %v1912, %v2201
        %v2333 = vadd.f32 %v1913, %v2299
        %v2334 = vadd.f32 %v1914, %v2204
        %v2335 = vadd.f32 %v1915, %v2302
        %v2336 = vadd.f32 %v1916, %v2206
        %v2337 = vadd.f32 %v1917, %v2304
        %2338 = vst [vmem:[#allocation2] sm:$0xff] %v2306
        %2339 = vst [vmem:[#allocation2 + $0x8] sm:$0xff] %v2307
        %2340 = vst [vmem:[#allocation2 + $0x10] sm:$0xff] %v2308
        %2341 = vst [vmem:[#allocation2 + $0x18] sm:$0xff] %v2309
        %2342 = vst [vmem:[#allocation2 + $0x20] sm:$0xff] %v2310
        %2343 = vst [vmem:[#allocation2 + $0x28] sm:$0xff] %v2311
        %2344 = vst [vmem:[#allocation2 + $0x30] sm:$0xff] %v2312
        %2345 = vst [vmem:[#allocation2 + $0x38] sm:$0xff] %v2313
        %2346 = vst [vmem:[#allocation2 + $0x40] sm:$0xff] %v2314
        %2347 = vst [vmem:[#allocation2 + $0x48] sm:$0xff] %v2315
        %2348 = vst [vmem:[#allocation2 + $0x50] sm:$0xff] %v2316
        %2349 = vst [vmem:[#allocation2 + $0x58] sm:$0xff] %v2317
        %2350 = vst [vmem:[#allocation2 + $0x60] sm:$0xff] %v2318
        %2351 = vst [vmem:[#allocation2 + $0x68] sm:$0xff] %v2319
        %2352 = vst [vmem:[#allocation2 + $0x70] sm:$0xff] %v2320
        %2353 = vst [vmem:[#allocation2 + $0x78] sm:$0xff] %v2321
        %2354 = vst [vmem:[#allocation2 + $0x80] sm:$0xff] %v2322
        %2355 = vst [vmem:[#allocation2 + $0x88] sm:$0xff] %v2323
        %2356 = vst [vmem:[#allocation2 + $0x90] sm:$0xff] %v2324
        %2357 = vst [vmem:[#allocation2 + $0x98] sm:$0xff] %v2325
        %2358 = vst [vmem:[#allocation2 + $0xa0] sm:$0xff] %v2326
        %2359 = vst [vmem:[#allocation2 + $0xa8] sm:$0xff] %v2327
        %2360 = vst [vmem:[#allocation2 + $0xb0] sm:$0xff] %v2328
        %2361 = vst [vmem:[#allocation2 + $0xb8] sm:$0xff] %v2329
        %2362 = vst [vmem:[#allocation2 + $0xc0] sm:$0xff] %v2330
        %2363 = vst [vmem:[#allocation2 + $0xc8] sm:$0xff] %v2331
        %2364 = vst [vmem:[#allocation2 + $0xd0] sm:$0xff] %v2332
        %2365 = vst [vmem:[#allocation2 + $0xd8] sm:$0xff] %v2333
        %2366 = vst [vmem:[#allocation2 + $0xe0] sm:$0xff] %v2334
        %2367 = vst [vmem:[#allocation2 + $0xe8] sm:$0xff] %v2335
        %2368 = vst [vmem:[#allocation2 + $0xf0] sm:$0xff] %v2336
        %2369 = vst [vmem:[#allocation2 + $0xf8] sm:$0xff] %v2337
        %p2370 = scmp.eq.s32.totalorder %s28, 1
        // Predicated region
        $region49: #{tpu_custom_call.1} parent=31 // pred_check
          %p2371 = pneg %p2370
        $region50: #{tpu_custom_call.1} parent=31 // pred_check_branch
          %2373 = sbr.rel (%p2371) target = $region52
        $region51: #{tpu_custom_call.1} parent=31 // pred_region
          %v2374 = vld [vmem:[#allocation2] sm:$0xff]
          %v2375 = vld [vmem:[#allocation2 + $0x8] sm:$0xff]
          %v2376 = vld [vmem:[#allocation2 + $0x10] sm:$0xff]
          %v2377 = vld [vmem:[#allocation2 + $0x18] sm:$0xff]
          %v2378 = vld [vmem:[#allocation2 + $0x20] sm:$0xff]
          %v2379 = vld [vmem:[#allocation2 + $0x28] sm:$0xff]
          %v2380 = vld [vmem:[#allocation2 + $0x30] sm:$0xff]
          %v2381 = vld [vmem:[#allocation2 + $0x38] sm:$0xff]
          %v2382 = vld [vmem:[#allocation2 + $0x40] sm:$0xff]
          %v2383 = vld [vmem:[#allocation2 + $0x48] sm:$0xff]
          %v2384 = vld [vmem:[#allocation2 + $0x50] sm:$0xff]
          %v2385 = vld [vmem:[#allocation2 + $0x58] sm:$0xff]
          %v2386 = vld [vmem:[#allocation2 + $0x60] sm:$0xff]
          %v2387 = vld [vmem:[#allocation2 + $0x68] sm:$0xff]
          %v2388 = vld [vmem:[#allocation2 + $0x70] sm:$0xff]
          %v2389 = vld [vmem:[#allocation2 + $0x78] sm:$0xff]
          %v2390 = vld [vmem:[#allocation2 + $0x80] sm:$0xff]
          %v2391 = vld [vmem:[#allocation2 + $0x88] sm:$0xff]
          %v2392 = vld [vmem:[#allocation2 + $0x90] sm:$0xff]
          %v2393 = vld [vmem:[#allocation2 + $0x98] sm:$0xff]
          %v2394 = vld [vmem:[#allocation2 + $0xa0] sm:$0xff]
          %v2395 = vld [vmem:[#allocation2 + $0xa8] sm:$0xff]
          %v2396 = vld [vmem:[#allocation2 + $0xb0] sm:$0xff]
          %v2397 = vld [vmem:[#allocation2 + $0xb8] sm:$0xff]
          %v2398 = vld [vmem:[#allocation2 + $0xc0] sm:$0xff]
          %v2399 = vld [vmem:[#allocation2 + $0xc8] sm:$0xff]
          %v2400 = vld [vmem:[#allocation2 + $0xd0] sm:$0xff]
          %v2401 = vld [vmem:[#allocation2 + $0xd8] sm:$0xff]
          %v2402 = vld [vmem:[#allocation2 + $0xe0] sm:$0xff]
          %v2403 = vld [vmem:[#allocation2 + $0xe8] sm:$0xff]
          %v2404 = vld [vmem:[#allocation2 + $0xf0] sm:$0xff]
          %v2405 = vld [vmem:[#allocation2 + $0xf8] sm:$0xff]
          %v2406 = vpack.c.bf16 %v2375, %v2374
          %v2407 = vpack.c.bf16 %v2377, %v2376
          %v2408 = vpack.c.bf16 %v2379, %v2378
          %v2409 = vpack.c.bf16 %v2381, %v2380
          %v2410 = vpack.c.bf16 %v2383, %v2382
          %v2411 = vpack.c.bf16 %v2385, %v2384
          %v2412 = vpack.c.bf16 %v2387, %v2386
          %v2413 = vpack.c.bf16 %v2389, %v2388
          %v2414 = vpack.c.bf16 %v2391, %v2390
          %v2415 = vpack.c.bf16 %v2393, %v2392
          %v2416 = vpack.c.bf16 %v2395, %v2394
          %v2417 = vpack.c.bf16 %v2397, %v2396
          %v2418 = vpack.c.bf16 %v2399, %v2398
          %v2419 = vpack.c.bf16 %v2401, %v2400
          %v2420 = vpack.c.bf16 %v2403, %v2402
          %v2421 = vpack.c.bf16 %v2405, %v2404
          %2422 = vst [vmem:[%s285] sm:$0xff] %v2406
          %2423 = vst [vmem:[%s285 + $0x8] sm:$0xff] %v2407
          %2424 = vst [vmem:[%s285 + $0x10] sm:$0xff] %v2408
          %2425 = vst [vmem:[%s285 + $0x18] sm:$0xff] %v2409
          %2426 = vst [vmem:[%s285 + $0x20] sm:$0xff] %v2410
          %2427 = vst [vmem:[%s285 + $0x28] sm:$0xff] %v2411
          %2428 = vst [vmem:[%s285 + $0x30] sm:$0xff] %v2412
          %2429 = vst [vmem:[%s285 + $0x38] sm:$0xff] %v2413
          %2430 = vst [vmem:[%s285 + $0x40] sm:$0xff] %v2414
          %2431 = vst [vmem:[%s285 + $0x48] sm:$0xff] %v2415
          %2432 = vst [vmem:[%s285 + $0x50] sm:$0xff] %v2416
          %2433 = vst [vmem:[%s285 + $0x58] sm:$0xff] %v2417
          %2434 = vst [vmem:[%s285 + $0x60] sm:$0xff] %v2418
          %2435 = vst [vmem:[%s285 + $0x68] sm:$0xff] %v2419
          %2436 = vst [vmem:[%s285 + $0x70] sm:$0xff] %v2420
          %2437 = vst [vmem:[%s285 + $0x78] sm:$0xff] %v2421
        $region52: #{tpu_custom_call.1} parent=31 // pred_fallthru
          _
        %s2438 = sand.u32 %s121, 1
        %s2439 = scalar_lea.sflag [#allocation5], %s2438
        %s2440 = sand.u32 %s121, 1
        %s2441 = smul.addr %s2440, 128
        %s2442 = scalar_lea.vmem [#allocation9], %s2441
        // Predicated region
        $region53: #{tpu_custom_call.1} parent=31 // pred_check
          %p2443 = pneg %p131
        $region54: #{tpu_custom_call.1} parent=31 // pred_check_branch
          %2445 = sbr.rel (%p2443) target = $region56
        $region55: #{tpu_custom_call.1} parent=31 // pred_region
          %s2446 = smul.u32 16, %s27
          %2448 = vsyncadd %s2439, 0
          %s2449 = smul.addr %s2446, 2
          %s2450 = smul.addr %s2449, 4
          %s2451 = scalar_lea.hbm %s3, %s2450
          %s2452 = sshll.u32 %s2442, 4
          %s2453 = int_to_ptr.vmem [resolvable:$true] %s2452
          %s2454 = sshll.u32 %s2451, 4
          %s2455 = int_to_ptr.hbm [resolvable:$true] %s2454
          %2460 = dma.vmem_to_hbm [thread:$0]  %s2453, 2048, %s2455, %s2439, 128, 128, 8
        $region56: #{tpu_custom_call.1} parent=31 // pred_fallthru
          _
      $region32: #{tpu_custom_call.1} parent=5 // pred_fallthru
        _
      %p2461 = scmp.le.s32.totalorder 2, %s18
      // Predicated region
      $region57: #{tpu_custom_call.1} parent=5 // pred_check
        %p2462 = pneg %p2461
      $region58: #{tpu_custom_call.1} parent=5 // pred_check_branch
        %2464 = sbr.rel (%p2462) target = $region60
      $region59: #{tpu_custom_call.1} parent=5 // pred_region
        %s2465 = ssub.s32 %s18, 2
        // Predicated region
        $region61: #{tpu_custom_call.1} parent=59 // pred_check
          %p2466 = pneg %p137
        $region62: #{tpu_custom_call.1} parent=59 // pred_check_branch
          %2468 = sbr.rel (%p2466) target = $region64
        $region63: #{tpu_custom_call.1} parent=59 // pred_region
          %s2469 = sand.u32 %s122, 1
          %s2470 = scalar_lea.sflag [#allocation5], %s2469
          %s2471 = sand.u32 %s122, 1
          %s2472 = smul.addr %s2471, 128
          %s2473 = scalar_lea.vmem [#allocation9], %s2472
          %2475 = dma.done %s2470, 2048
        $region64: #{tpu_custom_call.1} parent=59 // pred_fallthru
          _
      $region60: #{tpu_custom_call.1} parent=5 // pred_fallthru
        _
    $region6: #{tpu_custom_call.1} parent=1 // loop_footer
      %s22 = sadd.s32 1, %s18
    $region7: #{tpu_custom_call.1} parent=1 // loop_footer_branch
      %17 = sbr.rel target = $region3
    $region8: #{tpu_custom_call.1} parent=1 // loop_exit
      _
    %2476 = vsyncpa [#allocation4], 1
    %s2477 = scalar_lea.sflag [#allocation4], 1
    %2478 = vsyncpa %s2477, 1
    %2479 = vsyncpa [#allocation7], 1
    %s2480 = scalar_lea.sflag [#allocation7], 1
    %2481 = vsyncpa %s2480, 1
    %2482 = vsyncpa [#allocation5], 1
    %s2483 = scalar_lea.sflag [#allocation5], 1
    %2484 = vsyncpa %s2483, 1

</llo_original>
